<compile_context>
chip_gen: v6e
topology: v6e:2x2x1
jax: 0.10.0
libtpu: 0.0.40
codegen_flags: <defaults>
</compile_context>

<pallas_src>
import functools

import jax
import jax.numpy as jnp
import numpy as np
from jax.experimental import pallas as pl
from jax.experimental.pallas import tpu as pltpu


# ---------------------------------------------------------------------------
# Fused kernel: one grid step = Bt batch elements.
# ---------------------------------------------------------------------------
def _usd_kernel(feat_ref, mask_ref, w_stack_ref, b_stack_ref, w_taps_ref,
                shift_ref, edge_ref, enh_ref, fix_ref, pa_ref, x_scratch,
                *, H, W, C, P, Bt):
    HW = H * W

    # Bt is small (capped in the wrapper); a static Python loop is fully
    # unrolled at trace time and keeps all Ref indices static.
    for b in range(Bt):
        f = feat_ref[b]                                      # (C, HW) f32
        m = mask_ref[b]                                      # (1, HW)

        # ---- one stacked MXU matmul for conv-logits / proto-logits / importance ----
        stacked = jnp.dot(w_stack_ref[...], f,
                          preferred_element_type=jnp.float32) + b_stack_ref[...]  # (3P, HW)

        # per-pixel inverse feature norm (F.normalize over channels)
        inv_norm = 1.0 / jnp.maximum(
            jnp.sqrt(jnp.sum(f * f, axis=0, keepdims=True)), 1e-12)               # (1, HW)

        # rows [0:P]   : conv_w * (W_attn @ f + b_attn)      (already scaled/biased)
        # rows [P:2P]  : proto_w * P_norm @ f  -> * inv_norm gives proto logits
        # rows [2P:3P] : W_imp @ f + b_imp     -> mean over HW gives GAP'd pre-sigmoid
        part_logits = stacked[0:P] + stacked[P:2 * P] * inv_norm                  # (P, HW)

        # ---- softmax over parts, then multiply by object mask ----
        mx = jnp.max(part_logits, axis=0, keepdims=True)
        e = jnp.exp(part_logits - mx)
        pa = (e / jnp.sum(e, axis=0, keepdims=True)) * m                          # (P, HW)
        pa_ref[b] = pa

        # ---- semantic importance (GAP folded after matmul) & fixation weights ----
        sw = jax.nn.sigmoid(jnp.mean(stacked[2 * P:3 * P], axis=1, keepdims=True))  # (P, 1)
        fix_ref[b] = jnp.sum(pa * sw, axis=0, keepdims=True)                        # (1, HW)

        # ---- 3x3 part_refine conv over concat([features, part_attention]) ----
        # concat once into VMEM scratch (C rows are sublane-tile aligned).
        x_scratch[0:C, :] = f
        x_scratch[C:C + P, :] = pa
        x = x_scratch[...]                                                         # (C+P, HW)

        acc = jnp.zeros((C, HW), jnp.float32)
        k = 0
        for dy in (-1, 0, 1):
            for dx in (-1, 0, 1):
                s = dy * W + dx                    # flat shift: out[hw] <- x[hw + s]
                if s == 0:
                    xs = x                         # center tap: mask is all ones
                else:
                    xs = pltpu.roll(x, shift=(-s) % HW, axis=1) * edge_ref[k]
                acc = acc + jnp.dot(w_taps_ref[k], xs,
                                    preferred_element_type=jnp.float32)
                k += 1

        # conv bias + eval-mode BN already folded into w_taps / shift -> just ReLU
        enh_ref[b] = jnp.maximum(acc + shift_ref[...], 0.0)


# ---------------------------------------------------------------------------
# Batch-tile selection: amortize per-grid-step overhead, keep >=2 grid steps
# for megacore, stay far under scoped VMEM, keep the unrolled loop small.
# ---------------------------------------------------------------------------
def _choose_batch_tile(B, per_image_bytes, vmem_budget_bytes=8 << 20):
    bt = max(1, int(vmem_budget_bytes // (2 * per_image_bytes)))   # double-buffered
    bt = min(bt, 8)                                                # bound unrolled loop
    if B >= 2:
        bt = min(bt, max(1, B // 2))                               # keep grid >= 2 steps
    bt = min(bt, B)
    while B % bt:                                                  # exact tiling
        bt -= 1
    return bt


# ---------------------------------------------------------------------------
# Wrapper (glue: reshapes / constant folding only — one pallas launch)
# ---------------------------------------------------------------------------
def unsupervised_semantic_discovery(features, mask, params):
    B, C, H, W = features.shape
    P = params['part_prototypes'].shape[0]
    HW = H * W
    f32 = jnp.float32

    feat = features.astype(f32).reshape(B, C, HW)
    msk = mask.astype(f32).reshape(B, 1, HW)

    # ---- hoisted constant math ------------------------------------------------
    cw = jax.nn.softmax(params['combine_weight'].astype(f32))
    conv_w, proto_w = cw[0], cw[1]

    w_attn = params['part_attention_w'].reshape(P, C).astype(f32)
    b_attn = params['part_attention_b'].reshape(P, 1).astype(f32)
    protos = params['part_prototypes'].astype(f32)
    p_norm = protos / jnp.maximum(jnp.linalg.norm(protos, axis=1, keepdims=True), 1e-12)
    w_imp = params['semantic_importance_w'].reshape(P, C).astype(f32)
    b_imp = params['semantic_importance_b'].reshape(P, 1).astype(f32)

    w_stack = jnp.concatenate([conv_w * w_attn, proto_w * p_norm, w_imp], axis=0)  # (3P, C)
    b_stack = jnp.concatenate([conv_w * b_attn,
                               jnp.zeros((P, 1), f32), b_imp], axis=0)             # (3P, 1)

    # 3x3 refine conv weight with eval-mode BN folded into per-output-row scale.
    eps = 1e-5
    bn_scale = (params['bn_gamma'] / jnp.sqrt(params['bn_var'] + eps)).astype(f32)  # (C,)
    bn_shift = (params['bn_beta'].astype(f32) - params['bn_mean'].astype(f32) * bn_scale)
    w_refine = params['part_refine_w'].astype(f32) * bn_scale[:, None, None, None]  # (C,C+P,3,3)
    w_taps = jnp.transpose(w_refine, (2, 3, 0, 1)).reshape(9, C, C + P)             # per tap (C,C+P)
    shift = (params['part_refine_b'].astype(f32) * bn_scale + bn_shift).reshape(C, 1)

    # precomputed edge-validity masks (identical for every image / grid step)
    lane = np.arange(HW)
    row, col = lane // W, lane % W
    edge_np = np.stack([
        (((row + dy) >= 0) & ((row + dy) < H) & ((col + dx) >= 0) & ((col + dx) < W))
        for dy in (-1, 0, 1) for dx in (-1, 0, 1)
    ], axis=0).astype(np.float32).reshape(9, 1, HW)
    edge = jnp.asarray(edge_np)

    # ---- grid / specs -----------------------------------------------------------
    per_image_bytes = 4 * HW * (2 * C + 2 + P)
    Bt = _choose_batch_tile(B, per_image_bytes)
    grid = (B // Bt,)

    def batched(shape):
        return pl.BlockSpec((Bt,) + shape, lambda i: (i,) + (0,) * len(shape))

    def const(shape):
        return pl.BlockSpec(shape, lambda i: (0,) * len(shape))

    kernel = functools.partial(_usd_kernel, H=H, W=W, C=C, P=P, Bt=Bt)

    enh, fix, pa = pl.pallas_call(
        kernel,
        grid=grid,
        in_specs=[
            batched((C, HW)),          # features
            batched((1, HW)),          # mask
            const((3 * P, C)),         # stacked weight
            const((3 * P, 1)),         # stacked bias
            const((9, C, C + P)),      # per-tap refine weight (BN-folded)
            const((C, 1)),             # fused shift (refine bias + BN shift)
            const((9, 1, HW)),         # edge-validity masks
        ],
        out_specs=(
            batched((C, HW)),          # enhanced features
            batched((1, HW)),          # semantic fixation weights
            batched((P, HW)),          # part attention
        ),
        out_shape=(
            jax.ShapeDtypeStruct((B, C, HW), f32),
            jax.ShapeDtypeStruct((B, 1, HW), f32),
            jax.ShapeDtypeStruct((B, P, HW), f32),
        ),
        scratch_shapes=[pltpu.VMEM((C + P, HW), f32)],
        compiler_params=pltpu.CompilerParams(dimension_semantics=("parallel",)),
    )(feat, msk, w_stack, b_stack, w_taps, shift, edge)

    return (enh.reshape(B, C, H, W),
            fix.reshape(B, 1, H, W),
            pa.reshape(B, P, H, W))


# ---------------------------------------------------------------------------
# Plain-JAX reference (for correctness check)
# ---------------------------------------------------------------------------
def _usd_reference(features, mask, params):
    B, C, H, W = features.shape
    P = params['part_prototypes'].shape[0]

    w_attn = params['part_attention_w'].reshape(P, C)
    conv_logits = (jnp.einsum('pc,bchw->bphw', w_attn, features)
                   + params['part_attention_b'][None, :, None, None])

    f_flat = features.reshape(B, C, H * W)
    f_norm = f_flat / jnp.maximum(jnp.linalg.norm(f_flat, axis=1, keepdims=True), 1e-12)
    protos = params['part_prototypes']
    p_norm = protos / jnp.maximum(jnp.linalg.norm(protos, axis=1, keepdims=True), 1e-12)
    proto_logits = jnp.einsum('bch,nc->bnh', f_norm, p_norm).reshape(B, P, H, W)

    cw = jax.nn.softmax(params['combine_weight'])
    part_logits = cw[0] * conv_logits + cw[1] * proto_logits
    part_attention = jax.nn.softmax(part_logits, axis=1) * mask

    gap = jnp.mean(features, axis=(2, 3))                                  # (B, C)
    w_imp = params['semantic_importance_w'].reshape(P, C)
    sw = jax.nn.sigmoid(jnp.einsum('pc,bc->bp', w_imp, gap)
                        + params['semantic_importance_b'][None, :])
    fix = jnp.sum(part_attention * sw[:, :, None, None], axis=1, keepdims=True)

    x = jnp.concatenate([features, part_attention], axis=1)
    conv = jax.lax.conv_general_dilated(
        x, params['part_refine_w'], window_strides=(1, 1), padding='SAME',
        dimension_numbers=('NCHW', 'OIHW', 'NCHW'))
    conv = conv + params['part_refine_b'][None, :, None, None]
    eps = 1e-5
    bn = (conv - params['bn_mean'][None, :, None, None]) \
        / jnp.sqrt(params['bn_var'] + eps)[None, :, None, None]
    bn = bn * params['bn_gamma'][None, :, None, None] + params['bn_beta'][None, :, None, None]
    enh = jnp.maximum(bn, 0.0)
    return enh, fix, part_attention


# ---------------------------------------------------------------------------
if __name__ == "__main__":
    B, C, H, W = 2, 32, 16, 16
    P = 6

    key = jax.random.PRNGKey(0)
    keys = jax.random.split(key, 14)

    features = jax.random.normal(keys[0], (B, C, H, W), jnp.float32)
    mask = (jax.random.uniform(keys[1], (B, 1, H, W)) > 0.3).astype(jnp.float32)

    params = {
        'part_prototypes':       jax.random.normal(keys[2], (P, C), jnp.float32),
        'part_attention_w':      0.1 * jax.random.normal(keys[3], (P, C, 1, 1), jnp.float32),
        'part_attention_b':      0.1 * jax.random.normal(keys[4], (P,), jnp.float32),
        'combine_weight':        jnp.array([0.5, 0.5], jnp.float32),
        'part_refine_w':         0.05 * jax.random.normal(keys[5], (C, C + P, 3, 3), jnp.float32),
        'part_refine_b':         0.05 * jax.random.normal(keys[6], (C,), jnp.float32),
        'bn_gamma':              1.0 + 0.1 * jax.random.normal(keys[7], (C,), jnp.float32),
        'bn_beta':               0.1 * jax.random.normal(keys[8], (C,), jnp.float32),
        'bn_mean':               0.1 * jax.random.normal(keys[9], (C,), jnp.float32),
        'bn_var':                1.0 + 0.1 * jnp.abs(jax.random.normal(keys[10], (C,), jnp.float32)),
        'semantic_importance_w': 0.1 * jax.random.normal(keys[11], (P, C, 1, 1), jnp.float32),
        'semantic_importance_b': 0.1 * jax.random.normal(keys[12], (P,), jnp.float32),
    }

    usd_forward = jax.jit(unsupervised_semantic_discovery)
    enh, fix, pa = usd_forward(features, mask, params)
    jax.block_until_ready((enh, fix, pa))

    # correctness check against the plain-JAX reference (loose tol: MXU default precision)
    enh_r, fix_r, pa_r = _usd_reference(features, mask, params)
    np.testing.assert_allclose(np.asarray(pa), np.asarray(pa_r), rtol=2e-2, atol=2e-2)
    np.testing.assert_allclose(np.asarray(fix), np.asarray(fix_r), rtol=2e-2, atol=2e-2)
    np.testing.assert_allclose(np.asarray(enh), np.asarray(enh_r), rtol=2e-2, atol=2e-2)

    print("KERNEL_OK")
</pallas_src>

<mosaic_0001>
module attributes {stable_mosaic.version = 11 : i64} {
  func.func @_usd_kernel(%arg0: i32, %arg1: memref<1x32x256xf32, #tpu.memory_space<vmem>>, %arg2: memref<1x1x256xf32, #tpu.memory_space<vmem>>, %arg3: memref<18x32xf32, #tpu.memory_space<vmem>>, %arg4: memref<18x1xf32, #tpu.memory_space<vmem>>, %arg5: memref<9x32x38xf32, #tpu.memory_space<vmem>>, %arg6: memref<32x1xf32, #tpu.memory_space<vmem>>, %arg7: memref<9x1x256xf32, #tpu.memory_space<vmem>>, %arg8: memref<1x32x256xf32, #tpu.memory_space<vmem>>, %arg9: memref<1x1x256xf32, #tpu.memory_space<vmem>>, %arg10: memref<1x6x256xf32, #tpu.memory_space<vmem>>, %arg11: memref<38x256xf32, #tpu.memory_space<vmem>>) attributes {dimension_semantics = [#tpu.dimension_semantics<parallel>], iteration_bounds = array<i64: 2>, scalar_prefetch = 0 : i64, scratch_operands = 1 : i64, tpu.core_type = #tpu.core_type<tc>, window_params = [{transform_indices = @transform_0, window_bounds = array<i64: 1, 32, 256>}, {transform_indices = @transform_1, window_bounds = array<i64: 1, 1, 256>}, {pipeline_mode = #tpu.pipeline_mode<synchronous>, transform_indices = @transform_2, window_bounds = array<i64: 18, 32>}, {pipeline_mode = #tpu.pipeline_mode<synchronous>, transform_indices = @transform_3, window_bounds = array<i64: 18, 1>}, {pipeline_mode = #tpu.pipeline_mode<synchronous>, transform_indices = @transform_4, window_bounds = array<i64: 9, 32, 38>}, {pipeline_mode = #tpu.pipeline_mode<synchronous>, transform_indices = @transform_5, window_bounds = array<i64: 32, 1>}, {pipeline_mode = #tpu.pipeline_mode<synchronous>, transform_indices = @transform_6, window_bounds = array<i64: 9, 1, 256>}, {transform_indices = @transform_7, window_bounds = array<i64: 1, 32, 256>}, {transform_indices = @transform_8, window_bounds = array<i64: 1, 1, 256>}, {transform_indices = @transform_9, window_bounds = array<i64: 1, 6, 256>}]} {
    %c0 = arith.constant 0 : index
    %c0_0 = arith.constant 0 : index
    %c0_1 = arith.constant 0 : index
    %0 = vector.load %arg1[%c0, %c0_0, %c0_1] : memref<1x32x256xf32, #tpu.memory_space<vmem>>, vector<1x32x256xf32>
    %1 = vector.shape_cast %0 : vector<1x32x256xf32> to vector<32x256xf32>
    %c0_2 = arith.constant 0 : index
    %c0_3 = arith.constant 0 : index
    %c0_4 = arith.constant 0 : index
    %2 = vector.load %arg2[%c0_2, %c0_3, %c0_4] : memref<1x1x256xf32, #tpu.memory_space<vmem>>, vector<1x1x256xf32>
    %3 = vector.shape_cast %2 : vector<1x1x256xf32> to vector<1x256xf32>
    %c0_5 = arith.constant 0 : index
    %c0_6 = arith.constant 0 : index
    %4 = vector.load %arg3[%c0_5, %c0_6] : memref<18x32xf32, #tpu.memory_space<vmem>>, vector<18x32xf32>
    %cst = arith.constant dense<0.000000e+00> : vector<18x256xf32>
    %5 = tpu.matmul %4, %1, %cst {dimension_numbers = #tpu.dot_dimension_numbers<[1], [0], [0], [1], [0, 0, 1, 1], [], []>} : vector<18x32xf32>, vector<32x256xf32>, vector<18x256xf32> -> vector<18x256xf32>
    %c0_7 = arith.constant 0 : index
    %c0_8 = arith.constant 0 : index
    %6 = vector.load %arg4[%c0_7, %c0_8] : memref<18x1xf32, #tpu.memory_space<vmem>>, vector<18x1xf32>
    %7 = vector.broadcast %6 : vector<18x1xf32> to vector<18x256xf32>
    %8 = arith.addf %5, %7 : vector<18x256xf32>
    %9 = arith.mulf %1, %1 : vector<32x256xf32>
    %cst_9 = arith.constant dense<0.000000e+00> : vector<256xf32>
    %10 = vector.multi_reduction <add>, %9, %cst_9 [0] : vector<32x256xf32> to vector<256xf32>
    %11 = vector.shape_cast %10 : vector<256xf32> to vector<1x256xf32>
    %12 = math.sqrt %11 : vector<1x256xf32>
    %cst_10 = arith.constant 9.99999996E-13 : f32
    %13 = vector.broadcast %cst_10 : f32 to vector<1x256xf32>
    %14 = arith.maximumf %12, %13 : vector<1x256xf32>
    %cst_11 = arith.constant 1.000000e+00 : f32
    %15 = vector.broadcast %cst_11 : f32 to vector<1x256xf32>
    %16 = arith.divf %15, %14 : vector<1x256xf32>
    %17 = vector.extract_strided_slice %8 {offsets = [0, 0], sizes = [6, 256], strides = [1, 1]} : vector<18x256xf32> to vector<6x256xf32>
    %18 = vector.extract_strided_slice %8 {offsets = [6, 0], sizes = [6, 256], strides = [1, 1]} : vector<18x256xf32> to vector<6x256xf32>
    %19 = vector.broadcast %16 : vector<1x256xf32> to vector<6x256xf32>
    %20 = arith.mulf %18, %19 : vector<6x256xf32>
    %21 = arith.addf %17, %20 : vector<6x256xf32>
    %cst_12 = arith.constant dense<0xFF800000> : vector<256xf32>
    %22 = vector.multi_reduction <maximumf>, %21, %cst_12 [0] : vector<6x256xf32> to vector<256xf32>
    %23 = vector.shape_cast %22 : vector<256xf32> to vector<1x256xf32>
    %24 = vector.broadcast %23 : vector<1x256xf32> to vector<6x256xf32>
    %25 = arith.subf %21, %24 : vector<6x256xf32>
    %26 = math.exp %25 : vector<6x256xf32>
    %cst_13 = arith.constant dense<0.000000e+00> : vector<256xf32>
    %27 = vector.multi_reduction <add>, %26, %cst_13 [0] : vector<6x256xf32> to vector<256xf32>
    %28 = vector.shape_cast %27 : vector<256xf32> to vector<1x256xf32>
    %29 = vector.broadcast %28 : vector<1x256xf32> to vector<6x256xf32>
    %30 = arith.divf %26, %29 : vector<6x256xf32>
    %31 = vector.broadcast %3 : vector<1x256xf32> to vector<6x256xf32>
    %32 = arith.mulf %30, %31 : vector<6x256xf32>
    %c0_14 = arith.constant 0 : index
    %c0_15 = arith.constant 0 : index
    %c0_16 = arith.constant 0 : index
    %33 = vector.load %arg10[%c0_14, %c0_15, %c0_16] : memref<1x6x256xf32, #tpu.memory_space<vmem>>, vector<1x6x256xf32>
    %34 = vector.shape_cast %33 : vector<1x6x256xf32> to vector<6x256xf32>
    %35 = vector.shape_cast %32 : vector<6x256xf32> to vector<1x6x256xf32>
    tpu.vector_store %arg10[%c0_14, %c0_15, %c0_16], %35 {strides = array<i32>} : memref<1x6x256xf32, #tpu.memory_space<vmem>>, vector<1x6x256xf32>,
    %36 = vector.extract_strided_slice %8 {offsets = [12, 0], sizes = [6, 256], strides = [1, 1]} : vector<18x256xf32> to vector<6x256xf32>
    %cst_17 = arith.constant dense<0.000000e+00> : vector<6xf32>
    %37 = vector.multi_reduction <add>, %36, %cst_17 [1] : vector<6x256xf32> to vector<6xf32>
    %38 = vector.shape_cast %37 : vector<6xf32> to vector<6x1xf32>
    %cst_18 = arith.constant 2.560000e+02 : f32
    %39 = vector.broadcast %cst_18 : f32 to vector<6x1xf32>
    %40 = arith.divf %38, %39 : vector<6x1xf32>
    %41 = arith.negf %40 : vector<6x1xf32>
    %42 = math.exp %41 : vector<6x1xf32>
    %cst_19 = arith.constant 1.000000e+00 : f32
    %43 = vector.broadcast %cst_19 : f32 to vector<6x1xf32>
    %44 = arith.addf %43, %42 : vector<6x1xf32>
    %45 = arith.divf %43, %44 : vector<6x1xf32>
    %46 = vector.broadcast %45 : vector<6x1xf32> to vector<6x256xf32>
    %47 = arith.mulf %32, %46 : vector<6x256xf32>
    %cst_20 = arith.constant dense<0.000000e+00> : vector<256xf32>
    %48 = vector.multi_reduction <add>, %47, %cst_20 [0] : vector<6x256xf32> to vector<256xf32>
    %49 = vector.shape_cast %48 : vector<256xf32> to vector<1x256xf32>
    %c0_21 = arith.constant 0 : index
    %c0_22 = arith.constant 0 : index
    %c0_23 = arith.constant 0 : index
    %50 = vector.load %arg9[%c0_21, %c0_22, %c0_23] : memref<1x1x256xf32, #tpu.memory_space<vmem>>, vector<1x1x256xf32>
    %51 = vector.shape_cast %50 : vector<1x1x256xf32> to vector<1x256xf32>
    %52 = vector.shape_cast %49 : vector<1x256xf32> to vector<1x1x256xf32>
    tpu.vector_store %arg9[%c0_21, %c0_22, %c0_23], %52 {strides = array<i32>} : memref<1x1x256xf32, #tpu.memory_space<vmem>>, vector<1x1x256xf32>,
    %c0_24 = arith.constant 0 : index
    %c0_25 = arith.constant 0 : index
    %53 = vector.load %arg11[%c0_24, %c0_25] : memref<38x256xf32, #tpu.memory_space<vmem>>, vector<32x256xf32>
    tpu.vector_store %arg11[%c0_24, %c0_25], %1 {strides = array<i32>} : memref<38x256xf32, #tpu.memory_space<vmem>>, vector<32x256xf32>,
    %c32 = arith.constant 32 : index
    %c0_26 = arith.constant 0 : index
    %54 = vector.load %arg11[%c32, %c0_26] : memref<38x256xf32, #tpu.memory_space<vmem>>, vector<6x256xf32>
    tpu.vector_store %arg11[%c32, %c0_26], %32 {strides = array<i32>} : memref<38x256xf32, #tpu.memory_space<vmem>>, vector<6x256xf32>,
    %c0_27 = arith.constant 0 : index
    %c0_28 = arith.constant 0 : index
    %55 = vector.load %arg11[%c0_27, %c0_28] : memref<38x256xf32, #tpu.memory_space<vmem>>, vector<38x256xf32>
    %cst_29 = arith.constant 0.000000e+00 : f32
    %56 = vector.broadcast %cst_29 : f32 to vector<32x256xf32>
    %c17_i32 = arith.constant 17 : i32
    %57 = tpu.dynamic_rotate %55 by %c17_i32 dim 1 : vector<38x256xf32>, i32 -> vector<38x256xf32>
    %c0_30 = arith.constant 0 : index
    %c0_31 = arith.constant 0 : index
    %c0_32 = arith.constant 0 : index
    %58 = vector.load %arg7[%c0_30, %c0_31, %c0_32] : memref<9x1x256xf32, #tpu.memory_space<vmem>>, vector<1x1x256xf32>
    %59 = vector.shape_cast %58 : vector<1x1x256xf32> to vector<1x256xf32>
    %60 = vector.broadcast %59 : vector<1x256xf32> to vector<38x256xf32>
    %61 = arith.mulf %57, %60 : vector<38x256xf32>
    %c0_33 = arith.constant 0 : index
    %c0_34 = arith.constant 0 : index
    %c0_35 = arith.constant 0 : index
    %62 = vector.load %arg5[%c0_33, %c0_34, %c0_35] : memref<9x32x38xf32, #tpu.memory_space<vmem>>, vector<1x32x38xf32>
    %63 = vector.shape_cast %62 : vector<1x32x38xf32> to vector<32x38xf32>
    %cst_36 = arith.constant dense<0.000000e+00> : vector<32x256xf32>
    %64 = tpu.matmul %63, %61, %cst_36 {dimension_numbers = #tpu.dot_dimension_numbers<[1], [0], [0], [1], [0, 0, 1, 1], [], []>} : vector<32x38xf32>, vector<38x256xf32>, vector<32x256xf32> -> vector<32x256xf32>
    %65 = arith.addf %56, %64 : vector<32x256xf32>
    %c16_i32 = arith.constant 16 : i32
    %66 = tpu.dynamic_rotate %55 by %c16_i32 dim 1 : vector<38x256xf32>, i32 -> vector<38x256xf32>
    %c1 = arith.constant 1 : index
    %c0_37 = arith.constant 0 : index
    %c0_38 = arith.constant 0 : index
    %67 = vector.load %arg7[%c1, %c0_37, %c0_38] : memref<9x1x256xf32, #tpu.memory_space<vmem>>, vector<1x1x256xf32>
    %68 = vector.shape_cast %67 : vector<1x1x256xf32> to vector<1x256xf32>
    %69 = vector.broadcast %68 : vector<1x256xf32> to vector<38x256xf32>
    %70 = arith.mulf %66, %69 : vector<38x256xf32>
    %c1_39 = arith.constant 1 : index
    %c0_40 = arith.constant 0 : index
    %c0_41 = arith.constant 0 : index
    %71 = vector.load %arg5[%c1_39, %c0_40, %c0_41] : memref<9x32x38xf32, #tpu.memory_space<vmem>>, vector<1x32x38xf32>
    %72 = vector.shape_cast %71 : vector<1x32x38xf32> to vector<32x38xf32>
    %cst_42 = arith.constant dense<0.000000e+00> : vector<32x256xf32>
    %73 = tpu.matmul %72, %70, %cst_42 {dimension_numbers = #tpu.dot_dimension_numbers<[1], [0], [0], [1], [0, 0, 1, 1], [], []>} : vector<32x38xf32>, vector<38x256xf32>, vector<32x256xf32> -> vector<32x256xf32>
    %74 = arith.addf %65, %73 : vector<32x256xf32>
    %c15_i32 = arith.constant 15 : i32
    %75 = tpu.dynamic_rotate %55 by %c15_i32 dim 1 : vector<38x256xf32>, i32 -> vector<38x256xf32>
    %c2 = arith.constant 2 : index
    %c0_43 = arith.constant 0 : index
    %c0_44 = arith.constant 0 : index
    %76 = vector.load %arg7[%c2, %c0_43, %c0_44] : memref<9x1x256xf32, #tpu.memory_space<vmem>>, vector<1x1x256xf32>
    %77 = vector.shape_cast %76 : vector<1x1x256xf32> to vector<1x256xf32>
    %78 = vector.broadcast %77 : vector<1x256xf32> to vector<38x256xf32>
    %79 = arith.mulf %75, %78 : vector<38x256xf32>
    %c2_45 = arith.constant 2 : index
    %c0_46 = arith.constant 0 : index
    %c0_47 = arith.constant 0 : index
    %80 = vector.load %arg5[%c2_45, %c0_46, %c0_47] : memref<9x32x38xf32, #tpu.memory_space<vmem>>, vector<1x32x38xf32>
    %81 = vector.shape_cast %80 : vector<1x32x38xf32> to vector<32x38xf32>
    %cst_48 = arith.constant dense<0.000000e+00> : vector<32x256xf32>
    %82 = tpu.matmul %81, %79, %cst_48 {dimension_numbers = #tpu.dot_dimension_numbers<[1], [0], [0], [1], [0, 0, 1, 1], [], []>} : vector<32x38xf32>, vector<38x256xf32>, vector<32x256xf32> -> vector<32x256xf32>
    %83 = arith.addf %74, %82 : vector<32x256xf32>
    %c1_i32 = arith.constant 1 : i32
    %84 = tpu.dynamic_rotate %55 by %c1_i32 dim 1 : vector<38x256xf32>, i32 -> vector<38x256xf32>
    %c3 = arith.constant 3 : index
    %c0_49 = arith.constant 0 : index
    %c0_50 = arith.constant 0 : index
    %85 = vector.load %arg7[%c3, %c0_49, %c0_50] : memref<9x1x256xf32, #tpu.memory_space<vmem>>, vector<1x1x256xf32>
    %86 = vector.shape_cast %85 : vector<1x1x256xf32> to vector<1x256xf32>
    %87 = vector.broadcast %86 : vector<1x256xf32> to vector<38x256xf32>
    %88 = arith.mulf %84, %87 : vector<38x256xf32>
    %c3_51 = arith.constant 3 : index
    %c0_52 = arith.constant 0 : index
    %c0_53 = arith.constant 0 : index
    %89 = vector.load %arg5[%c3_51, %c0_52, %c0_53] : memref<9x32x38xf32, #tpu.memory_space<vmem>>, vector<1x32x38xf32>
    %90 = vector.shape_cast %89 : vector<1x32x38xf32> to vector<32x38xf32>
    %cst_54 = arith.constant dense<0.000000e+00> : vector<32x256xf32>
    %91 = tpu.matmul %90, %88, %cst_54 {dimension_numbers = #tpu.dot_dimension_numbers<[1], [0], [0], [1], [0, 0, 1, 1], [], []>} : vector<32x38xf32>, vector<38x256xf32>, vector<32x256xf32> -> vector<32x256xf32>
    %92 = arith.addf %83, %91 : vector<32x256xf32>
    %c4 = arith.constant 4 : index
    %c0_55 = arith.constant 0 : index
    %c0_56 = arith.constant 0 : index
    %93 = vector.load %arg5[%c4, %c0_55, %c0_56] : memref<9x32x38xf32, #tpu.memory_space<vmem>>, vector<1x32x38xf32>
    %94 = vector.shape_cast %93 : vector<1x32x38xf32> to vector<32x38xf32>
    %cst_57 = arith.constant dense<0.000000e+00> : vector<32x256xf32>
    %95 = tpu.matmul %94, %55, %cst_57 {dimension_numbers = #tpu.dot_dimension_numbers<[1], [0], [0], [1], [0, 0, 1, 1], [], []>} : vector<32x38xf32>, vector<38x256xf32>, vector<32x256xf32> -> vector<32x256xf32>
    %96 = arith.addf %92, %95 : vector<32x256xf32>
    %c255_i32 = arith.constant 255 : i32
    %97 = tpu.dynamic_rotate %55 by %c255_i32 dim 1 : vector<38x256xf32>, i32 -> vector<38x256xf32>
    %c5 = arith.constant 5 : index
    %c0_58 = arith.constant 0 : index
    %c0_59 = arith.constant 0 : index
    %98 = vector.load %arg7[%c5, %c0_58, %c0_59] : memref<9x1x256xf32, #tpu.memory_space<vmem>>, vector<1x1x256xf32>
    %99 = vector.shape_cast %98 : vector<1x1x256xf32> to vector<1x256xf32>
    %100 = vector.broadcast %99 : vector<1x256xf32> to vector<38x256xf32>
    %101 = arith.mulf %97, %100 : vector<38x256xf32>
    %c5_60 = arith.constant 5 : index
    %c0_61 = arith.constant 0 : index
    %c0_62 = arith.constant 0 : index
    %102 = vector.load %arg5[%c5_60, %c0_61, %c0_62] : memref<9x32x38xf32, #tpu.memory_space<vmem>>, vector<1x32x38xf32>
    %103 = vector.shape_cast %102 : vector<1x32x38xf32> to vector<32x38xf32>
    %cst_63 = arith.constant dense<0.000000e+00> : vector<32x256xf32>
    %104 = tpu.matmul %103, %101, %cst_63 {dimension_numbers = #tpu.dot_dimension_numbers<[1], [0], [0], [1], [0, 0, 1, 1], [], []>} : vector<32x38xf32>, vector<38x256xf32>, vector<32x256xf32> -> vector<32x256xf32>
    %105 = arith.addf %96, %104 : vector<32x256xf32>
    %c241_i32 = arith.constant 241 : i32
    %106 = tpu.dynamic_rotate %55 by %c241_i32 dim 1 : vector<38x256xf32>, i32 -> vector<38x256xf32>
    %c6 = arith.constant 6 : index
    %c0_64 = arith.constant 0 : index
    %c0_65 = arith.constant 0 : index
    %107 = vector.load %arg7[%c6, %c0_64, %c0_65] : memref<9x1x256xf32, #tpu.memory_space<vmem>>, vector<1x1x256xf32>
    %108 = vector.shape_cast %107 : vector<1x1x256xf32> to vector<1x256xf32>
    %109 = vector.broadcast %108 : vector<1x256xf32> to vector<38x256xf32>
    %110 = arith.mulf %106, %109 : vector<38x256xf32>
    %c6_66 = arith.constant 6 : index
    %c0_67 = arith.constant 0 : index
    %c0_68 = arith.constant 0 : index
    %111 = vector.load %arg5[%c6_66, %c0_67, %c0_68] : memref<9x32x38xf32, #tpu.memory_space<vmem>>, vector<1x32x38xf32>
    %112 = vector.shape_cast %111 : vector<1x32x38xf32> to vector<32x38xf32>
    %cst_69 = arith.constant dense<0.000000e+00> : vector<32x256xf32>
    %113 = tpu.matmul %112, %110, %cst_69 {dimension_numbers = #tpu.dot_dimension_numbers<[1], [0], [0], [1], [0, 0, 1, 1], [], []>} : vector<32x38xf32>, vector<38x256xf32>, vector<32x256xf32> -> vector<32x256xf32>
    %114 = arith.addf %105, %113 : vector<32x256xf32>
    %c240_i32 = arith.constant 240 : i32
    %115 = tpu.dynamic_rotate %55 by %c240_i32 dim 1 : vector<38x256xf32>, i32 -> vector<38x256xf32>
    %c7 = arith.constant 7 : index
    %c0_70 = arith.constant 0 : index
    %c0_71 = arith.constant 0 : index
    %116 = vector.load %arg7[%c7, %c0_70, %c0_71] : memref<9x1x256xf32, #tpu.memory_space<vmem>>, vector<1x1x256xf32>
    %117 = vector.shape_cast %116 : vector<1x1x256xf32> to vector<1x256xf32>
    %118 = vector.broadcast %117 : vector<1x256xf32> to vector<38x256xf32>
    %119 = arith.mulf %115, %118 : vector<38x256xf32>
    %c7_72 = arith.constant 7 : index
    %c0_73 = arith.constant 0 : index
    %c0_74 = arith.constant 0 : index
    %120 = vector.load %arg5[%c7_72, %c0_73, %c0_74] : memref<9x32x38xf32, #tpu.memory_space<vmem>>, vector<1x32x38xf32>
    %121 = vector.shape_cast %120 : vector<1x32x38xf32> to vector<32x38xf32>
    %cst_75 = arith.constant dense<0.000000e+00> : vector<32x256xf32>
    %122 = tpu.matmul %121, %119, %cst_75 {dimension_numbers = #tpu.dot_dimension_numbers<[1], [0], [0], [1], [0, 0, 1, 1], [], []>} : vector<32x38xf32>, vector<38x256xf32>, vector<32x256xf32> -> vector<32x256xf32>
    %123 = arith.addf %114, %122 : vector<32x256xf32>
    %c239_i32 = arith.constant 239 : i32
    %124 = tpu.dynamic_rotate %55 by %c239_i32 dim 1 : vector<38x256xf32>, i32 -> vector<38x256xf32>
    %c8 = arith.constant 8 : index
    %c0_76 = arith.constant 0 : index
    %c0_77 = arith.constant 0 : index
    %125 = vector.load %arg7[%c8, %c0_76, %c0_77] : memref<9x1x256xf32, #tpu.memory_space<vmem>>, vector<1x1x256xf32>
    %126 = vector.shape_cast %125 : vector<1x1x256xf32> to vector<1x256xf32>
    %127 = vector.broadcast %126 : vector<1x256xf32> to vector<38x256xf32>
    %128 = arith.mulf %124, %127 : vector<38x256xf32>
    %c8_78 = arith.constant 8 : index
    %c0_79 = arith.constant 0 : index
    %c0_80 = arith.constant 0 : index
    %129 = vector.load %arg5[%c8_78, %c0_79, %c0_80] : memref<9x32x38xf32, #tpu.memory_space<vmem>>, vector<1x32x38xf32>
    %130 = vector.shape_cast %129 : vector<1x32x38xf32> to vector<32x38xf32>
    %cst_81 = arith.constant dense<0.000000e+00> : vector<32x256xf32>
    %131 = tpu.matmul %130, %128, %cst_81 {dimension_numbers = #tpu.dot_dimension_numbers<[1], [0], [0], [1], [0, 0, 1, 1], [], []>} : vector<32x38xf32>, vector<38x256xf32>, vector<32x256xf32> -> vector<32x256xf32>
    %132 = arith.addf %123, %131 : vector<32x256xf32>
    %c0_82 = arith.constant 0 : index
    %c0_83 = arith.constant 0 : index
    %133 = vector.load %arg6[%c0_82, %c0_83] : memref<32x1xf32, #tpu.memory_space<vmem>>, vector<32x1xf32>
    %134 = vector.broadcast %133 : vector<32x1xf32> to vector<32x256xf32>
    %135 = arith.addf %132, %134 : vector<32x256xf32>
    %cst_84 = arith.constant 0.000000e+00 : f32
    %136 = vector.broadcast %cst_84 : f32 to vector<32x256xf32>
    %137 = arith.maximumf %135, %136 : vector<32x256xf32>
    %c0_85 = arith.constant 0 : index
    %c0_86 = arith.constant 0 : index
    %c0_87 = arith.constant 0 : index
    %138 = vector.load %arg8[%c0_85, %c0_86, %c0_87] : memref<1x32x256xf32, #tpu.memory_space<vmem>>, vector<1x32x256xf32>
    %139 = vector.shape_cast %138 : vector<1x32x256xf32> to vector<32x256xf32>
    %140 = vector.shape_cast %137 : vector<32x256xf32> to vector<1x32x256xf32>
    tpu.vector_store %arg8[%c0_85, %c0_86, %c0_87], %140 {strides = array<i32>} : memref<1x32x256xf32, #tpu.memory_space<vmem>>, vector<1x32x256xf32>,
    return
  }
  func.func @transform_0(%arg0: i32) -> (i32, i32, i32) {
    %c0_i32 = arith.constant 0 : i32
    %c0_i32_0 = arith.constant 0 : i32
    %c0_i32_1 = arith.constant 0 : i32
    return %arg0, %c0_i32, %c0_i32_0 : i32, i32, i32
  }
  func.func @transform_1(%arg0: i32) -> (i32, i32, i32) {
    %c0_i32 = arith.constant 0 : i32
    %c0_i32_0 = arith.constant 0 : i32
    %c0_i32_1 = arith.constant 0 : i32
    return %arg0, %c0_i32, %c0_i32_0 : i32, i32, i32
  }
  func.func @transform_2(%arg0: i32) -> (i32, i32) {
    %c0_i32 = arith.constant 0 : i32
    %c0_i32_0 = arith.constant 0 : i32
    %c0_i32_1 = arith.constant 0 : i32
    return %c0_i32, %c0_i32_0 : i32, i32
  }
  func.func @transform_3(%arg0: i32) -> (i32, i32) {
    %c0_i32 = arith.constant 0 : i32
    %c0_i32_0 = arith.constant 0 : i32
    %c0_i32_1 = arith.constant 0 : i32
    return %c0_i32, %c0_i32_0 : i32, i32
  }
  func.func @transform_4(%arg0: i32) -> (i32, i32, i32) {
    %c0_i32 = arith.constant 0 : i32
    %c0_i32_0 = arith.constant 0 : i32
    %c0_i32_1 = arith.constant 0 : i32
    %c0_i32_2 = arith.constant 0 : i32
    return %c0_i32, %c0_i32_0, %c0_i32_1 : i32, i32, i32
  }
  func.func @transform_5(%arg0: i32) -> (i32, i32) {
    %c0_i32 = arith.constant 0 : i32
    %c0_i32_0 = arith.constant 0 : i32
    %c0_i32_1 = arith.constant 0 : i32
    return %c0_i32, %c0_i32_0 : i32, i32
  }
  func.func @transform_6(%arg0: i32) -> (i32, i32, i32) {
    %c0_i32 = arith.constant 0 : i32
    %c0_i32_0 = arith.constant 0 : i32
    %c0_i32_1 = arith.constant 0 : i32
    %c0_i32_2 = arith.constant 0 : i32
    return %c0_i32, %c0_i32_0, %c0_i32_1 : i32, i32, i32
  }
  func.func @transform_7(%arg0: i32) -> (i32, i32, i32) {
    %c0_i32 = arith.constant 0 : i32
    %c0_i32_0 = arith.constant 0 : i32
    %c0_i32_1 = arith.constant 0 : i32
    return %arg0, %c0_i32, %c0_i32_0 : i32, i32, i32
  }
  func.func @transform_8(%arg0: i32) -> (i32, i32, i32) {
    %c0_i32 = arith.constant 0 : i32
    %c0_i32_0 = arith.constant 0 : i32
    %c0_i32_1 = arith.constant 0 : i32
    return %arg0, %c0_i32, %c0_i32_0 : i32, i32, i32
  }
  func.func @transform_9(%arg0: i32) -> (i32, i32, i32) {
    %c0_i32 = arith.constant 0 : i32
    %c0_i32_0 = arith.constant 0 : i32
    %c0_i32_1 = arith.constant 0 : i32
    return %arg0, %c0_i32, %c0_i32_0 : i32, i32, i32
  }
}

</mosaic_0001>

<llo_original>
// kernel: unsupervised_semantic_discovery.1
$region0: #{unsupervised_semantic_discovery.1}
  #allocation0 [shape = 'u32[]', space=smem, size = 0x4, offset = 0x4, fixed_abs, tag = 'smem constant byte address 0x4 - core index']
  #allocation1 [shape = 'u32[144,128]{1,0:T(1,128)}', space=vmem, size = 0x12000, scoped, tag = 'internal scratch']
  #allocation2 [shape = 'f32[38,256]{1,0:T(8,128)}', space=vmem, size = 0xa000, scoped, tag = 'scratch operand']
  %s0 = inlined_call_operand.vmem [shape: f32[2,32,256], index: 0, kind: input, shape index: {}]
  %s1 = inlined_call_operand.vmem [shape: f32[2,1,256], index: 1, kind: input, shape index: {}]
  %s2 = inlined_call_operand.vmem [shape: f32[18,32], index: 2, kind: input, shape index: {}]
  %s3 = inlined_call_operand.vmem [shape: f32[18,1], index: 3, kind: input, shape index: {}]
  %s4 = inlined_call_operand.vmem [shape: f32[9,32,38], index: 4, kind: input, shape index: {}]
  %s5 = inlined_call_operand.vmem [shape: f32[32,1], index: 5, kind: input, shape index: {}]
  %s6 = inlined_call_operand.vmem [shape: f32[9,1,256], index: 6, kind: input, shape index: {}]
  %s7 = inlined_call_operand.vmem [shape: f32[2,32,256], index: 7, kind: output, shape index: {0}]
  %s8 = inlined_call_operand.vmem [shape: f32[2,1,256], index: 8, kind: output, shape index: {1}]
  %s9 = inlined_call_operand.vmem [shape: f32[2,6,256], index: 9, kind: output, shape index: {2}]
  %10 = xla_tuple %s7, %s8, %s9
  %s11 = sld [smem:[#allocation0]]
  $region77: #{unsupervised_semantic_discovery.1} parent=0
    _
  %s13 = ssub.s32 1, %s11
  %s14 = scalar_select 0, %s13, %s11
  loop: start=0, step=1, limit=4
  $region2: #{unsupervised_semantic_discovery.1} parent=0 // loop_pre_header
    _
  $region3: #{unsupervised_semantic_discovery.1} parent=0 // loop_header
    %s16 = sphi 0, %s20
    %p17 = scmp.ge.s32.totalorder %s16, 4
    %s26 = sphi 0, %s28
    %s29 = sphi 0, %s26
    %s30 = sphi 0, %s29
    %s46 = sphi 0, %s30
    %s52 = sphi 0, %s54
    %s55 = sphi 0, %s52
    %s56 = sphi 0, %s55
    %s72 = sphi 0, %s56
    %s76 = sphi 0, %s76
    %s78 = sphi 0, %s76
    %s79 = sphi 0, %s78
    %s93 = sphi 0, %s79
    %s97 = sphi 0, %s97
    %s99 = sphi 0, %s97
    %s100 = sphi 0, %s99
    %s114 = sphi 0, %s100
    %s118 = sphi 0, %s118
    %s120 = sphi 0, %s118
    %s121 = sphi 0, %s120
    %s135 = sphi 0, %s121
    %s139 = sphi 0, %s139
    %s141 = sphi 0, %s139
    %s142 = sphi 0, %s141
    %s156 = sphi 0, %s142
    %s160 = sphi 0, %s160
    %s162 = sphi 0, %s160
    %s163 = sphi 0, %s162
    %s177 = sphi 0, %s163
    %s183 = sphi 0, %s185
    %s186 = sphi 0, %s183
    %s187 = sphi 0, %s186
    %s203 = sphi 0, %s187
    %s209 = sphi 0, %s211
    %s212 = sphi 0, %s209
    %s213 = sphi 0, %s212
    %s229 = sphi 0, %s213
    %s235 = sphi 0, %s237
    %s238 = sphi 0, %s235
    %s239 = sphi 0, %s238
    %s255 = sphi 0, %s239
  $region4: #{unsupervised_semantic_discovery.1} parent=0 // loop_header_branch
    %19 = sbr.rel (%p17) target = $region8
  $region5: #{unsupervised_semantic_discovery.1} parent=0 // loop_body
    %s21 = ssub.s32 %s16, 1
    %s22 = ssub.s32 %s16, 2
    %s23 = sadd.s32 %s16, 1
    %s24 = ssub.s32 %s16, %s23
    %p25 = scmp.eq.s32.totalorder %s24, 0
    %s27 = sadd.s32 %s26, 1
    %s28 = scalar_select %p25, %s26, %s27
    %p31 = pneg %p25
    %p32 = scmp.eq.s32.totalorder %s16, 1
    %p33 = por %p31, %p32
    %p34 = scmp.ne.s32.totalorder %s26, %s29
    %p35 = scmp.eq.s32.totalorder %s16, 0
    %p36 = por %p34, %p35
    %p37 = scmp.ne.s32.totalorder %s26, %s29
    %p38 = scmp.eq.s32.totalorder %s21, 1
    %p39 = por %p37, %p38
    %p40 = scmp.ne.s32.totalorder %s29, %s30
    %p41 = scmp.eq.s32.totalorder %s21, 0
    %p42 = por %p40, %p41
    %p43 = scmp.ne.s32.totalorder %s29, %s30
    %p44 = scmp.eq.s32.totalorder %s22, 1
    %p45 = por %p43, %p44
    %p47 = scmp.ne.s32.totalorder %s30, %s46
    %p48 = scmp.eq.s32.totalorder %s22, 0
    %p49 = por %p47, %p48
    %s50 = ssub.s32 %s16, %s23
    %p51 = scmp.eq.s32.totalorder %s50, 0
    %s53 = sadd.s32 %s52, 1
    %s54 = scalar_select %p51, %s52, %s53
    %p57 = pneg %p51
    %p58 = scmp.eq.s32.totalorder %s16, 1
    %p59 = por %p57, %p58
    %p60 = scmp.ne.s32.totalorder %s52, %s55
    %p61 = scmp.eq.s32.totalorder %s16, 0
    %p62 = por %p60, %p61
    %p63 = scmp.ne.s32.totalorder %s52, %s55
    %p64 = scmp.eq.s32.totalorder %s21, 1
    %p65 = por %p63, %p64
    %p66 = scmp.ne.s32.totalorder %s55, %s56
    %p67 = scmp.eq.s32.totalorder %s21, 0
    %p68 = por %p66, %p67
    %p69 = scmp.ne.s32.totalorder %s55, %s56
    %p70 = scmp.eq.s32.totalorder %s22, 1
    %p71 = por %p69, %p70
    %p73 = scmp.ne.s32.totalorder %s56, %s72
    %p74 = scmp.eq.s32.totalorder %s22, 0
    %p75 = por %p73, %p74
    %s77 = sadd.s32 %s76, 1
    %p80 = scmp.eq.s32.totalorder %s16, 1
    %p81 = scmp.ne.s32.totalorder %s76, %s78
    %p82 = scmp.eq.s32.totalorder %s16, 0
    %p83 = por %p81, %p82
    %p84 = scmp.ne.s32.totalorder %s76, %s78
    %p85 = scmp.eq.s32.totalorder %s21, 1
    %p86 = por %p84, %p85
    %p87 = scmp.ne.s32.totalorder %s78, %s79
    %p88 = scmp.eq.s32.totalorder %s21, 0
    %p89 = por %p87, %p88
    %p90 = scmp.ne.s32.totalorder %s78, %s79
    %p91 = scmp.eq.s32.totalorder %s22, 1
    %p92 = por %p90, %p91
    %p94 = scmp.ne.s32.totalorder %s79, %s93
    %p95 = scmp.eq.s32.totalorder %s22, 0
    %p96 = por %p94, %p95
    %s98 = sadd.s32 %s97, 1
    %p101 = scmp.eq.s32.totalorder %s16, 1
    %p102 = scmp.ne.s32.totalorder %s97, %s99
    %p103 = scmp.eq.s32.totalorder %s16, 0
    %p104 = por %p102, %p103
    %p105 = scmp.ne.s32.totalorder %s97, %s99
    %p106 = scmp.eq.s32.totalorder %s21, 1
    %p107 = por %p105, %p106
    %p108 = scmp.ne.s32.totalorder %s99, %s100
    %p109 = scmp.eq.s32.totalorder %s21, 0
    %p110 = por %p108, %p109
    %p111 = scmp.ne.s32.totalorder %s99, %s100
    %p112 = scmp.eq.s32.totalorder %s22, 1
    %p113 = por %p111, %p112
    %p115 = scmp.ne.s32.totalorder %s100, %s114
    %p116 = scmp.eq.s32.totalorder %s22, 0
    %p117 = por %p115, %p116
    %s119 = sadd.s32 %s118, 1
    %p122 = scmp.eq.s32.totalorder %s16, 1
    %p123 = scmp.ne.s32.totalorder %s118, %s120
    %p124 = scmp.eq.s32.totalorder %s16, 0
    %p125 = por %p123, %p124
    %p126 = scmp.ne.s32.totalorder %s118, %s120
    %p127 = scmp.eq.s32.totalorder %s21, 1
    %p128 = por %p126, %p127
    %p129 = scmp.ne.s32.totalorder %s120, %s121
    %p130 = scmp.eq.s32.totalorder %s21, 0
    %p131 = por %p129, %p130
    %p132 = scmp.ne.s32.totalorder %s120, %s121
    %p133 = scmp.eq.s32.totalorder %s22, 1
    %p134 = por %p132, %p133
    %p136 = scmp.ne.s32.totalorder %s121, %s135
    %p137 = scmp.eq.s32.totalorder %s22, 0
    %p138 = por %p136, %p137
    %s140 = sadd.s32 %s139, 1
    %p143 = scmp.eq.s32.totalorder %s16, 1
    %p144 = scmp.ne.s32.totalorder %s139, %s141
    %p145 = scmp.eq.s32.totalorder %s16, 0
    %p146 = por %p144, %p145
    %p147 = scmp.ne.s32.totalorder %s139, %s141
    %p148 = scmp.eq.s32.totalorder %s21, 1
    %p149 = por %p147, %p148
    %p150 = scmp.ne.s32.totalorder %s141, %s142
    %p151 = scmp.eq.s32.totalorder %s21, 0
    %p152 = por %p150, %p151
    %p153 = scmp.ne.s32.totalorder %s141, %s142
    %p154 = scmp.eq.s32.totalorder %s22, 1
    %p155 = por %p153, %p154
    %p157 = scmp.ne.s32.totalorder %s142, %s156
    %p158 = scmp.eq.s32.totalorder %s22, 0
    %p159 = por %p157, %p158
    %s161 = sadd.s32 %s160, 1
    %p164 = scmp.eq.s32.totalorder %s16, 1
    %p165 = scmp.ne.s32.totalorder %s160, %s162
    %p166 = scmp.eq.s32.totalorder %s16, 0
    %p167 = por %p165, %p166
    %p168 = scmp.ne.s32.totalorder %s160, %s162
    %p169 = scmp.eq.s32.totalorder %s21, 1
    %p170 = por %p168, %p169
    %p171 = scmp.ne.s32.totalorder %s162, %s163
    %p172 = scmp.eq.s32.totalorder %s21, 0
    %p173 = por %p171, %p172
    %p174 = scmp.ne.s32.totalorder %s162, %s163
    %p175 = scmp.eq.s32.totalorder %s22, 1
    %p176 = por %p174, %p175
    %p178 = scmp.ne.s32.totalorder %s163, %s177
    %p179 = scmp.eq.s32.totalorder %s22, 0
    %p180 = por %p178, %p179
    %s181 = ssub.s32 %s16, %s23
    %p182 = scmp.eq.s32.totalorder %s181, 0
    %s184 = sadd.s32 %s183, 1
    %s185 = scalar_select %p182, %s183, %s184
    %p188 = pneg %p182
    %p189 = scmp.eq.s32.totalorder %s16, 1
    %p190 = por %p188, %p189
    %p191 = scmp.ne.s32.totalorder %s183, %s186
    %p192 = scmp.eq.s32.totalorder %s16, 0
    %p193 = por %p191, %p192
    %p194 = scmp.ne.s32.totalorder %s183, %s186
    %p195 = scmp.eq.s32.totalorder %s21, 1
    %p196 = por %p194, %p195
    %p197 = scmp.ne.s32.totalorder %s186, %s187
    %p198 = scmp.eq.s32.totalorder %s21, 0
    %p199 = por %p197, %p198
    %p200 = scmp.ne.s32.totalorder %s186, %s187
    %p201 = scmp.eq.s32.totalorder %s22, 1
    %p202 = por %p200, %p201
    %p204 = scmp.ne.s32.totalorder %s187, %s203
    %p205 = scmp.eq.s32.totalorder %s22, 0
    %p206 = por %p204, %p205
    %s207 = ssub.s32 %s16, %s23
    %p208 = scmp.eq.s32.totalorder %s207, 0
    %s210 = sadd.s32 %s209, 1
    %s211 = scalar_select %p208, %s209, %s210
    %p214 = pneg %p208
    %p215 = scmp.eq.s32.totalorder %s16, 1
    %p216 = por %p214, %p215
    %p217 = scmp.ne.s32.totalorder %s209, %s212
    %p218 = scmp.eq.s32.totalorder %s16, 0
    %p219 = por %p217, %p218
    %p220 = scmp.ne.s32.totalorder %s209, %s212
    %p221 = scmp.eq.s32.totalorder %s21, 1
    %p222 = por %p220, %p221
    %p223 = scmp.ne.s32.totalorder %s212, %s213
    %p224 = scmp.eq.s32.totalorder %s21, 0
    %p225 = por %p223, %p224
    %p226 = scmp.ne.s32.totalorder %s212, %s213
    %p227 = scmp.eq.s32.totalorder %s22, 1
    %p228 = por %p226, %p227
    %p230 = scmp.ne.s32.totalorder %s213, %s229
    %p231 = scmp.eq.s32.totalorder %s22, 0
    %p232 = por %p230, %p231
    %s233 = ssub.s32 %s16, %s23
    %p234 = scmp.eq.s32.totalorder %s233, 0
    %s236 = sadd.s32 %s235, 1
    %s237 = scalar_select %p234, %s235, %s236
    %p240 = pneg %p234
    %p241 = scmp.eq.s32.totalorder %s16, 1
    %p242 = por %p240, %p241
    %p243 = scmp.ne.s32.totalorder %s235, %s238
    %p244 = scmp.eq.s32.totalorder %s16, 0
    %p245 = por %p243, %p244
    %p246 = scmp.ne.s32.totalorder %s235, %s238
    %p247 = scmp.eq.s32.totalorder %s21, 1
    %p248 = por %p246, %p247
    %p249 = scmp.ne.s32.totalorder %s238, %s239
    %p250 = scmp.eq.s32.totalorder %s21, 0
    %p251 = por %p249, %p250
    %p252 = scmp.ne.s32.totalorder %s238, %s239
    %p253 = scmp.eq.s32.totalorder %s22, 1
    %p254 = por %p252, %p253
    %p256 = scmp.ne.s32.totalorder %s239, %s255
    %p257 = scmp.eq.s32.totalorder %s22, 0
    %p258 = por %p256, %p257
    %p259 = scmp.le.s32.totalorder 1, %s16
    %p260 = scmp.lt.s32.totalorder %s16, 3
    %p261 = pnand %p259, %p260
    %p262 = pneg %p261
    // Predicated region
    $region9: #{unsupervised_semantic_discovery.1} parent=5 // pred_check
      _
    $region10: #{unsupervised_semantic_discovery.1} parent=5 // pred_check_branch
      %264 = sbr.rel (%p261) target = $region12
    $region11: #{unsupervised_semantic_discovery.1} parent=5 // pred_region
      %s265 = ssub.s32 %s16, 1
      // Predicated region
      $region13: #{unsupervised_semantic_discovery.1} parent=11 // pred_check
        %p266 = pneg %p89
      $region14: #{unsupervised_semantic_discovery.1} parent=11 // pred_check_branch
        %268 = sbr.rel (%p266) target = $region16
      $region15: #{unsupervised_semantic_discovery.1} parent=11 // pred_region
        _
      $region16: #{unsupervised_semantic_discovery.1} parent=11 // pred_fallthru
        _
      // Predicated region
      $region17: #{unsupervised_semantic_discovery.1} parent=11 // pred_check
        %p269 = pneg %p110
      $region18: #{unsupervised_semantic_discovery.1} parent=11 // pred_check_branch
        %271 = sbr.rel (%p269) target = $region20
      $region19: #{unsupervised_semantic_discovery.1} parent=11 // pred_region
        _
      $region20: #{unsupervised_semantic_discovery.1} parent=11 // pred_fallthru
        _
      // Predicated region
      $region21: #{unsupervised_semantic_discovery.1} parent=11 // pred_check
        %p272 = pneg %p131
      $region22: #{unsupervised_semantic_discovery.1} parent=11 // pred_check_branch
        %274 = sbr.rel (%p272) target = $region24
      $region23: #{unsupervised_semantic_discovery.1} parent=11 // pred_region
        _
      $region24: #{unsupervised_semantic_discovery.1} parent=11 // pred_fallthru
        _
      // Predicated region
      $region25: #{unsupervised_semantic_discovery.1} parent=11 // pred_check
        %p275 = pneg %p152
      $region26: #{unsupervised_semantic_discovery.1} parent=11 // pred_check_branch
        %277 = sbr.rel (%p275) target = $region28
      $region27: #{unsupervised_semantic_discovery.1} parent=11 // pred_region
        _
      $region28: #{unsupervised_semantic_discovery.1} parent=11 // pred_fallthru
        _
      // Predicated region
      $region29: #{unsupervised_semantic_discovery.1} parent=11 // pred_check
        %p278 = pneg %p173
      $region30: #{unsupervised_semantic_discovery.1} parent=11 // pred_check_branch
        %280 = sbr.rel (%p278) target = $region32
      $region31: #{unsupervised_semantic_discovery.1} parent=11 // pred_region
        _
      $region32: #{unsupervised_semantic_discovery.1} parent=11 // pred_fallthru
        _
    $region12: #{unsupervised_semantic_discovery.1} parent=5 // pred_fallthru
      _
    %p281 = scmp.lt.s32.totalorder %s16, 2
    // Predicated region
    $region33: #{unsupervised_semantic_discovery.1} parent=5 // pred_check
      %p282 = pneg %p281
    $region34: #{unsupervised_semantic_discovery.1} parent=5 // pred_check_branch
      %284 = sbr.rel (%p282) target = $region36
    $region35: #{unsupervised_semantic_discovery.1} parent=5 // pred_region
      // Predicated region
      $region37: #{unsupervised_semantic_discovery.1} parent=35 // pred_check
        %p285 = pneg %p36
      $region38: #{unsupervised_semantic_discovery.1} parent=35 // pred_check_branch
        %287 = sbr.rel (%p285) target = $region40
      $region39: #{unsupervised_semantic_discovery.1} parent=35 // pred_region
        %p288 = scmp.lt.s32.totalorder %s16, 1
        %s289 = scalar_select %p288, %s16, 1
        %s290 = smul.addr %s289, 8
        %s291 = smul.addr %s290, 8
        %s292 = scalar_lea.vmem %s0, %s291
      $region40: #{unsupervised_semantic_discovery.1} parent=35 // pred_fallthru
        _
      // Predicated region
      $region41: #{unsupervised_semantic_discovery.1} parent=35 // pred_check
        %p293 = pneg %p62
      $region42: #{unsupervised_semantic_discovery.1} parent=35 // pred_check_branch
        %295 = sbr.rel (%p293) target = $region44
      $region43: #{unsupervised_semantic_discovery.1} parent=35 // pred_region
        %p296 = scmp.lt.s32.totalorder %s16, 1
        %s297 = scalar_select %p296, %s16, 1
        %s298 = smul.addr %s297, 2
        %s299 = scalar_lea.vmem %s1, %s298
      $region44: #{unsupervised_semantic_discovery.1} parent=35 // pred_fallthru
        _
    $region36: #{unsupervised_semantic_discovery.1} parent=5 // pred_fallthru
      _
    %p300 = scmp.le.s32.totalorder 1, %s16
    %p301 = scmp.lt.s32.totalorder %s16, 3
    %p302 = pnand %p300, %p301
    %p303 = pneg %p302
    // Predicated region
    $region45: #{unsupervised_semantic_discovery.1} parent=5 // pred_check
      _
    $region46: #{unsupervised_semantic_discovery.1} parent=5 // pred_check_branch
      %305 = sbr.rel (%p302) target = $region48
    $region47: #{unsupervised_semantic_discovery.1} parent=5 // pred_region
      %s306 = ssub.s32 %s16, 1
      %p307 = scmp.lt.s32.totalorder %s21, 1
      %s308 = scalar_select %p307, %s21, 1
      %s309 = smul.addr %s308, 8
      %s310 = smul.addr %s309, 8
      %s311 = scalar_lea.vmem %s0, %s310
      %p312 = pneg %p42
      %p313 = pneg %p39
      %p314 = scmp.lt.s32.totalorder %s21, 1
      %s315 = scalar_select %p314, %s21, 1
      %s316 = smul.addr %s315, 2
      %s317 = scalar_lea.vmem %s1, %s316
      %p318 = pneg %p68
      %p319 = pneg %p65
      %p320 = pneg %p89
      %p321 = pneg %p86
      %p322 = pneg %p110
      %p323 = pneg %p107
      %p324 = pneg %p131
      %p325 = pneg %p128
      %p326 = pneg %p152
      %p327 = pneg %p149
      %p328 = pneg %p173
      %p329 = pneg %p170
      %p330 = pneg %p199
      %p331 = pneg %p196
      %p332 = scmp.lt.s32.totalorder %s21, 1
      %s333 = scalar_select %p332, %s21, 1
      %s334 = smul.addr %s333, 8
      %s335 = smul.addr %s334, 8
      %s336 = scalar_lea.vmem %s7, %s335
      %p337 = pneg %p225
      %p338 = pneg %p222
      %p339 = scmp.lt.s32.totalorder %s21, 1
      %s340 = scalar_select %p339, %s21, 1
      %s341 = smul.addr %s340, 2
      %s342 = scalar_lea.vmem %s8, %s341
      %p343 = pneg %p251
      %p344 = pneg %p248
      %p345 = scmp.lt.s32.totalorder %s21, 1
      %s346 = scalar_select %p345, %s21, 1
      %s347 = smul.addr %s346, 2
      %s348 = smul.addr %s347, 8
      %s349 = scalar_lea.vmem %s9, %s348
      %p350 = scmp.lt.s32.totalorder %s21, 1
      %s351 = scalar_select %p350, %s21, 1
      %s352 = smul.addr %s351, 8
      %s353 = smul.addr %s352, 8
      %s354 = scalar_lea.vmem %s0, %s353
      %p355 = scmp.lt.s32.totalorder %s21, 1
      %s356 = scalar_select %p355, %s21, 1
      %s357 = smul.addr %s356, 2
      %s358 = scalar_lea.vmem %s1, %s357
      %p359 = scmp.lt.s32.totalorder %s21, 1
      %s360 = scalar_select %p359, %s21, 1
      %s361 = smul.addr %s360, 8
      %s362 = smul.addr %s361, 8
      %s363 = scalar_lea.vmem %s7, %s362
      %p364 = scmp.lt.s32.totalorder %s21, 1
      %s365 = scalar_select %p364, %s21, 1
      %s366 = smul.addr %s365, 2
      %s367 = scalar_lea.vmem %s8, %s366
      %p368 = scmp.lt.s32.totalorder %s21, 1
      %s369 = scalar_select %p368, %s21, 1
      %s370 = smul.addr %s369, 2
      %s371 = smul.addr %s370, 8
      %s372 = scalar_lea.vmem %s9, %s371
      %v373 = vld [vmem:[%s354] sm:$0xff]
      %v374 = vld [vmem:[%s354 + $0x8] sm:$0xff]
      %v375 = vld [vmem:[%s354 + $0x10] sm:$0xff]
      %v376 = vld [vmem:[%s354 + $0x18] sm:$0xff]
      %v377 = vld [vmem:[%s354 + $0x20] sm:$0xff]
      %v378 = vld [vmem:[%s354 + $0x28] sm:$0xff]
      %v379 = vld [vmem:[%s354 + $0x30] sm:$0xff]
      %v380 = vld [vmem:[%s354 + $0x38] sm:$0xff]
      %v381 = vld [vmem:[%s358] sm:$0x3]
      %v382 = vld [vmem:[%s2] sm:$0xff]
      %v383 = vld [vmem:[%s2 + $0x8] sm:$0xff]
      %v384 = vld [vmem:[%s2 + $0x10] sm:$0x3]
      %v385 = vld [vmem:[%s3] sm:$0xff]
      %v386 = vld [vmem:[%s3 + $0x8] sm:$0xff]
      %v387 = vld [vmem:[%s3 + $0x10] sm:$0x3]
      %389 = vset.pattern.permute.xlu0 0
      %390 = vperm.xlu0 %389, %v385
      %v391 = vpop.permute.xlu0 %390
      %394 = vset.pattern.permute.xlu0 0
      %395 = vperm.xlu0 %394, %v386
      %v396 = vpop.permute.xlu0 %395
      %399 = vset.pattern.permute.xlu0 0
      %400 = vperm.xlu0 %399, %v387
      %v401 = vpop.permute.xlu0 %400
      %vm403 = vcmask 261120
      %v405 = vsel %vm403, %v382, 0
      %v408 = vsel %vm403, %v383, 0
      %v411 = vsel %vm403, %v384, 0
      %413 = vmatprep.subr.mxu0 0.0
      %414 = vmatpush1.msra.mxu0 0.0
      %415 = vmatprep.subr.mxu0 0.0
      %416 = vmatpush1.msra.mxu0 0.0
      %417 = vmatprep.subr.mxu0 0.0
      %418 = vmatpush1.msra.mxu0 0.0
      %419 = vmatprep.subr.mxu0 0.0
      %420 = vmatpush1.msra.mxu0 0.0
      %421 = vmatprep.subr.mxu0 0.0
      %422 = vmatpush1.msra.mxu0 0.0
      %423 = vmatprep.subr.mxu0 0.0
      %424 = vmatpush1.msra.mxu0 0.0
      %425 = vmatprep.subr.mxu0 0.0
      %426 = vmatpush1.msra.mxu0 0.0
      %427 = vmatprep.subr.mxu0 0.0
      %428 = vmatpush1.msra.mxu0 0.0
      %429 = vmatprep.subr.mxu0 0.0
      %430 = vmatpush1.msra.mxu0 0.0
      %431 = vmatprep.subr.mxu0 0.0
      %432 = vmatpush1.msra.mxu0 0.0
      %433 = vmatprep.subr.mxu0 0.0
      %434 = vmatpush1.msra.mxu0 0.0
      %435 = vmatprep.subr.mxu0 0.0
      %436 = vmatpush1.msra.mxu0 0.0
      %437 = vmatprep.subr.mxu0 %v380
      %438 = vmatpush1.msra.mxu0 %v379
      %439 = vmatprep.subr.mxu0 %v378
      %440 = vmatpush1.msra.mxu0 %v377
      %441 = vmatprep.subr.mxu0 %v376
      %442 = vmatpush1.msra.mxu0 %v375
      %443 = vmatprep.subr.mxu0 %v374
      %444 = vmatpush1.msra.mxu0 %v373
      %445 = vmatprep.subr.mxu0 0.0
      %446 = vmatpush2.msra.mxu0 0.0
      %447 = vmatprep.subr.mxu0 0.0
      %448 = vmatpush2.msra.mxu0 0.0
      %449 = vmatprep.subr.mxu0 0.0
      %450 = vmatpush2.msra.mxu0 0.0
      %451 = vmatprep.subr.mxu0 0.0
      %452 = vmatpush2.msra.mxu0 0.0
      %453 = vmatprep.subr.mxu0 0.0
      %454 = vmatpush2.msra.mxu0 0.0
      %455 = vmatprep.subr.mxu0 0.0
      %456 = vmatpush2.msra.mxu0 0.0
      %457 = vmatprep.subr.mxu0 0.0
      %458 = vmatpush2.msra.mxu0 0.0
      %459 = vmatprep.subr.mxu0 0.0
      %460 = vmatpush2.msra.mxu0 0.0
      %461 = vmatprep.subr.mxu0 0.0
      %462 = vmatpush2.msra.mxu0 0.0
      %463 = vmatprep.subr.mxu0 0.0
      %464 = vmatpush2.msra.mxu0 0.0
      %465 = vmatprep.subr.mxu0 0.0
      %466 = vmatpush2.msra.mxu0 0.0
      %467 = vmatprep.subr.mxu0 0.0
      %468 = vmatpush2.msra.mxu0 0.0
      %469 = vmatprep.subr.mxu0 0.0
      %470 = vmatpush2.msra.mxu0 0.0
      %471 = vmatprep.subr.mxu0 0.0
      %472 = vmatpush2.msra.mxu0 0.0
      %473 = vmatprep.subr.mxu0 0.0
      %474 = vmatpush2.msra.mxu0 0.0
      %475 = vmatprep.subr.mxu0 0.0
      %476 = vmatpush2.msra.mxu0 0.0
      %477 = vmatprep.mubr.f32.mxu0 0.0
      %478 = vmatmul.mubr.f32.gmra.mxu0 %v405
      %v479 = vpop.f32.mrf.mxu0
      %v480 = vadd.f32 %v391, %v479
      %v481 = vpop.f32.mrf.mxu0
      %v482 = vadd.f32 %v391, %v481
      %483 = vmatprep.mubr.f32.mxu0 0.0
      %484 = vmatmul.mubr.f32.gmra.mxu0 %v408
      %v485 = vpop.f32.mrf.mxu0
      %v486 = vadd.f32 %v396, %v485
      %v487 = vpop.f32.mrf.mxu0
      %v488 = vadd.f32 %v396, %v487
      %489 = vmatprep.mubr.f32.mxu0 0.0
      %490 = vmatmul.mubr.f32.gmra.mxu0 %v411
      %v491 = vpop.f32.mrf.mxu0
      %v492 = vadd.f32 %v401, %v491
      %v493 = vpop.f32.mrf.mxu0
      %v494 = vadd.f32 %v401, %v493
      %495 = vdwg.mxu0
      %v496 = vmul.f32 %v373, %v373
      %v497 = vmul.f32 %v374, %v374
      %v498 = vmul.f32 %v375, %v375
      %v499 = vmul.f32 %v376, %v376
      %v500 = vmul.f32 %v377, %v377
      %v501 = vmul.f32 %v378, %v378
      %v502 = vmul.f32 %v379, %v379
      %v503 = vmul.f32 %v380, %v380
      %v504 = vadd.f32 %v496, %v498
      %v505 = vadd.f32 %v504, %v500
      %v506 = vadd.f32 %v505, %v502
      %v507 = vrot.slane %v506, 4
      %v508 = vadd.f32 %v506, %v507
      %v509 = vrot.slane %v508, 2
      %v510 = vadd.f32 %v508, %v509
      %v511 = vrot.slane %v510, 1
      %v512 = vadd.f32 %v510, %v511
      %v513 = vadd.f32 %v497, %v499
      %v514 = vadd.f32 %v513, %v501
      %v515 = vadd.f32 %v514, %v503
      %v516 = vrot.slane %v515, 4
      %v517 = vadd.f32 %v515, %v516
      %v518 = vrot.slane %v517, 2
      %v519 = vadd.f32 %v517, %v518
      %v520 = vrot.slane %v519, 1
      %v521 = vadd.f32 %v519, %v520
      %v522 = vrsqrt.pop %v512
      %v523 = vmul.f32 %v512, %v522
      %vm524 = vcmp.eq.f32.partialorder %v512, inf
      %v525 = vsel %vm524, %v512, %v523
      %vm526 = vcmp.eq.f32.partialorder %v512, 0.0
      %v527 = vand.u32 %v512, 2147483648
      %v528 = vsel %vm526, %v527, %v525
      %v529 = vrsqrt.pop %v521
      %v530 = vmul.f32 %v521, %v529
      %vm531 = vcmp.eq.f32.partialorder %v521, inf
      %v532 = vsel %vm531, %v521, %v530
      %vm533 = vcmp.eq.f32.partialorder %v521, 0.0
      %v534 = vand.u32 %v521, 2147483648
      %v535 = vsel %vm533, %v534, %v532
      %v536 = vmax.f32 %v528, 1e-12
      %v537 = vmax.f32 %v535, 1e-12
      %v538 = vrcp.pop %v536
      %v539 = vmul.f32 1.0, %v538
      %v540 = vrcp.pop %v537
      %v541 = vmul.f32 1.0, %v540
      %v542 = vmul.f32 %v480, %v539
      %v543 = vmul.f32 %v482, %v541
      %v544 = vmul.f32 %v486, %v539
      %v545 = vmul.f32 %v488, %v541
      %vm550 = vcmask 1041408
      %v551 = vrot.slane %v542, 6
      %v552 = vrot.slane %v544, 6
      %v553 = vsel %vm550, %v551, %v552
      %v554 = vrot.slane %v543, 6
      %v555 = vrot.slane %v545, 6
      %v556 = vsel %vm550, %v554, %v555
      %v559 = vadd.f32 %v480, %v553
      %v560 = vadd.f32 %v482, %v556
      %vm561 = vcmask 1045504
      %v562 = vsel %vm561, %v559, -inf
      %v563 = vrot.slane %v562, 4
      %v564 = vmax.f32 %v562, %v563
      %v565 = vrot.slane %v564, 2
      %v566 = vmax.f32 %v564, %v565
      %v567 = vrot.slane %v566, 1
      %v568 = vmax.f32 %v566, %v567
      %v569 = vsel %vm561, %v560, -inf
      %v570 = vrot.slane %v569, 4
      %v571 = vmax.f32 %v569, %v570
      %v572 = vrot.slane %v571, 2
      %v573 = vmax.f32 %v571, %v572
      %v574 = vrot.slane %v573, 1
      %v575 = vmax.f32 %v573, %v574
      %v576 = vsub.f32 %v559, %v568
      %v577 = vsub.f32 %v560, %v575
      %v578 = vmul.f32 %v576, 1.442695
      %v579 = vpow.pop %v578
      %v580 = vmul.f32 %v577, 1.442695
      %v581 = vpow.pop %v580
      %v582 = vsel %vm561, %v579, 0.0
      %v583 = vrot.slane %v582, 4
      %v584 = vadd.f32 %v582, %v583
      %v585 = vrot.slane %v584, 2
      %v586 = vadd.f32 %v584, %v585
      %v587 = vrot.slane %v586, 1
      %v588 = vadd.f32 %v586, %v587
      %v589 = vsel %vm561, %v581, 0.0
      %v590 = vrot.slane %v589, 4
      %v591 = vadd.f32 %v589, %v590
      %v592 = vrot.slane %v591, 2
      %v593 = vadd.f32 %v591, %v592
      %v594 = vrot.slane %v593, 1
      %v595 = vadd.f32 %v593, %v594
      %v596 = vrcp.pop %v588
      %v597 = vmul.f32 %v579, %v596
      %v598 = vrcp.pop %v595
      %v599 = vmul.f32 %v581, %v598
      %v601 = vlaneseq
      %v602 = vshrl.u32 %v601, 7
      %v603 = vsub.s32 0, %v602
      %v604 = vrot.slane %v381, %v603
      %v605 = vlaneseq
      %v606 = vshrl.u32 %v605, 7
      %v607 = vsub.s32 1, %v606
      %v608 = vrot.slane %v381, %v607
      %v611 = vmul.f32 %v597, %v604
      %v612 = vmul.f32 %v599, %v608
      %613 = vst [vmem:[%s372] sm:$0x3f] %v611
      %614 = vst [vmem:[%s372 + $0x8] sm:$0x3f] %v612
      %vm615 = vcmask 1047556
      %v616 = vsel %vm615, %v486, 0.0
      %v617 = vsel %vm615, %v488, 0.0
      %v618 = vadd.f32 %v616, %v617
      %619 = vadd.xlane.f32.xlu0 %v618
      %v620 = vpop.xlane.xlu0 %619
      %v621 = vsel %vm550, %v492, 0.0
      %v622 = vsel %vm550, %v494, 0.0
      %v623 = vadd.f32 %v621, %v622
      %624 = vadd.xlane.f32.xlu0 %v623
      %v625 = vpop.xlane.xlu0 %624
      %v626 = vrcp.pop 256.0
      %v627 = vmul.f32 %v620, %v626
      %v628 = vmul.f32 %v625, %v626
      %v629 = vxor.u32 %v627, 2147483648
      %v630 = vxor.u32 %v628, 2147483648
      %v631 = vmul.f32 %v629, 1.442695
      %v632 = vpow.pop %v631
      %v633 = vmul.f32 %v630, 1.442695
      %v634 = vpow.pop %v633
      %v635 = vadd.f32 %v632, 1.0
      %v636 = vadd.f32 %v634, 1.0
      %v637 = vrcp.pop %v635
      %v638 = vmul.f32 1.0, %v637
      %v639 = vrcp.pop %v636
      %v640 = vmul.f32 1.0, %v639
      %vm643 = vcmask 1043456
      %v644 = vrot.slane %v638, 4
      %v645 = vrot.slane %v640, 4
      %v646 = vsel %vm643, %v644, %v645
      %v648 = vmul.f32 %v611, %v646
      %v649 = vmul.f32 %v612, %v646
      %v650 = vsel %vm561, %v648, 0.0
      %v651 = vrot.slane %v650, 4
      %v652 = vadd.f32 %v650, %v651
      %v653 = vrot.slane %v652, 2
      %v654 = vadd.f32 %v652, %v653
      %v655 = vrot.slane %v654, 1
      %v656 = vadd.f32 %v654, %v655
      %v657 = vsel %vm561, %v649, 0.0
      %v658 = vrot.slane %v657, 4
      %v659 = vadd.f32 %v657, %v658
      %v660 = vrot.slane %v659, 2
      %v661 = vadd.f32 %v659, %v660
      %v662 = vrot.slane %v661, 1
      %v663 = vadd.f32 %v661, %v662
      %v666 = vcombine.low %v656, %v663
      %v668 = vunpack.c.l.s4 1966171168
      %v669 = vunpack.c.0.s8 %v668
      %v670 = vlaneseq
      %v671 = vshrl.u32 %v670, 7
      %v672 = vsub.s32 %v669, %v671
      %v673 = vrot.slane %v666, %v672
      %v675 = vunpack.c.l.s4 1966171168
      %v676 = vunpack.c.0.s8 %v675
      %v677 = vlaneseq
      %v678 = vshrl.u32 %v677, 7
      %v679 = vsub.s32 %v676, %v678
      %v680 = vrot.slane %v673, %v679
      %v682 = vlaneseq
      %vm683 = vcmp.ge.s32.totalorder %v682, 0
      %vm684 = vcmp.lt.s32.totalorder %v682, 256
      %vm685 = vmand %vm683, %vm684
      %686 = vst.msk [vmem:[%s367] sm:$0x3] %vm685, %v680
      %687 = vst [vmem:[#allocation2] sm:$0xff] %v373
      %688 = vst [vmem:[#allocation2 + $0x8] sm:$0xff] %v374
      %689 = vst [vmem:[#allocation2 + $0x10] sm:$0xff] %v375
      %690 = vst [vmem:[#allocation2 + $0x18] sm:$0xff] %v376
      %691 = vst [vmem:[#allocation2 + $0x20] sm:$0xff] %v377
      %692 = vst [vmem:[#allocation2 + $0x28] sm:$0xff] %v378
      %693 = vst [vmem:[#allocation2 + $0x30] sm:$0xff] %v379
      %694 = vst [vmem:[#allocation2 + $0x38] sm:$0xff] %v380
      %695 = vst [vmem:[#allocation2 + $0x40] sm:$0x3f] %v611
      %696 = vst [vmem:[#allocation2 + $0x48] sm:$0x3f] %v612
      %v697 = vld [vmem:[#allocation2] sm:$0xff]
      %v698 = vld [vmem:[#allocation2 + $0x8] sm:$0xff]
      %v699 = vld [vmem:[#allocation2 + $0x10] sm:$0xff]
      %v700 = vld [vmem:[#allocation2 + $0x18] sm:$0xff]
      %v701 = vld [vmem:[#allocation2 + $0x20] sm:$0xff]
      %v702 = vld [vmem:[#allocation2 + $0x28] sm:$0xff]
      %v703 = vld [vmem:[#allocation2 + $0x30] sm:$0xff]
      %v704 = vld [vmem:[#allocation2 + $0x38] sm:$0xff]
      %v705 = vld [vmem:[#allocation2 + $0x40] sm:$0x3f]
      %v706 = vld [vmem:[#allocation2 + $0x48] sm:$0x3f]
      %707 = vrot.lane.b32.xlu0 %v697, 17
      %v708 = vpop.permute.xlu0 %707
      %709 = vrot.lane.b32.xlu0 %v699, 17
      %v710 = vpop.permute.xlu0 %709
      %711 = vrot.lane.b32.xlu0 %v701, 17
      %v712 = vpop.permute.xlu0 %711
      %713 = vrot.lane.b32.xlu0 %v703, 17
      %v714 = vpop.permute.xlu0 %713
      %715 = vrot.lane.b32.xlu0 %v705, 17
      %v716 = vpop.permute.xlu0 %715
      %717 = vrot.lane.b32.xlu0 %v698, 17
      %v718 = vpop.permute.xlu0 %717
      %719 = vrot.lane.b32.xlu0 %v700, 17
      %v720 = vpop.permute.xlu0 %719
      %721 = vrot.lane.b32.xlu0 %v702, 17
      %v722 = vpop.permute.xlu0 %721
      %723 = vrot.lane.b32.xlu0 %v704, 17
      %v724 = vpop.permute.xlu0 %723
      %725 = vrot.lane.b32.xlu0 %v706, 17
      %v726 = vpop.permute.xlu0 %725
      %v727 = vlaneseq
      %v728 = vand.u32 %v727, 127
      %vm729 = vcmp.lt.s32.totalorder %v728, 17
      %v730 = vsel %vm729, %v708, %v718
      %v731 = vsel %vm729, %v710, %v720
      %v732 = vsel %vm729, %v712, %v722
      %v733 = vsel %vm729, %v714, %v724
      %v734 = vsel %vm729, %v716, %v726
      %v735 = vsel %vm729, %v718, %v708
      %v736 = vsel %vm729, %v720, %v710
      %v737 = vsel %vm729, %v722, %v712
      %v738 = vsel %vm729, %v724, %v714
      %v739 = vsel %vm729, %v726, %v716
      %v740 = vld [vmem:[%s6] sm:$0x3]
      %v742 = vlaneseq
      %v743 = vshrl.u32 %v742, 7
      %v744 = vsub.s32 0, %v743
      %v745 = vrot.slane %v740, %v744
      %v746 = vlaneseq
      %v747 = vshrl.u32 %v746, 7
      %v748 = vsub.s32 1, %v747
      %v749 = vrot.slane %v740, %v748
      %v752 = vmul.f32 %v735, %v745
      %v753 = vmul.f32 %v730, %v749
      %v754 = vmul.f32 %v736, %v745
      %v755 = vmul.f32 %v731, %v749
      %v756 = vmul.f32 %v737, %v745
      %v757 = vmul.f32 %v732, %v749
      %v758 = vmul.f32 %v738, %v745
      %v759 = vmul.f32 %v733, %v749
      %v760 = vmul.f32 %v739, %v745
      %v761 = vmul.f32 %v734, %v749
      %v762 = vld [vmem:[%s4] sm:$0xff]
      %v763 = vld [vmem:[%s4 + $0x8] sm:$0xff]
      %v764 = vld [vmem:[%s4 + $0x10] sm:$0xff]
      %v765 = vld [vmem:[%s4 + $0x18] sm:$0xff]
      %766 = vrot.lane.b32.xlu0 %v697, 16
      %v767 = vpop.permute.xlu0 %766
      %768 = vrot.lane.b32.xlu0 %v699, 16
      %v769 = vpop.permute.xlu0 %768
      %770 = vrot.lane.b32.xlu0 %v701, 16
      %v771 = vpop.permute.xlu0 %770
      %772 = vrot.lane.b32.xlu0 %v703, 16
      %v773 = vpop.permute.xlu0 %772
      %774 = vrot.lane.b32.xlu0 %v705, 16
      %v775 = vpop.permute.xlu0 %774
      %776 = vrot.lane.b32.xlu0 %v698, 16
      %v777 = vpop.permute.xlu0 %776
      %778 = vrot.lane.b32.xlu0 %v700, 16
      %v779 = vpop.permute.xlu0 %778
      %780 = vrot.lane.b32.xlu0 %v702, 16
      %v781 = vpop.permute.xlu0 %780
      %782 = vrot.lane.b32.xlu0 %v704, 16
      %v783 = vpop.permute.xlu0 %782
      %784 = vrot.lane.b32.xlu0 %v706, 16
      %v785 = vpop.permute.xlu0 %784
      %vm786 = vcmp.lt.s32.totalorder %v728, 16
      %v787 = vsel %vm786, %v767, %v777
      %v788 = vsel %vm786, %v769, %v779
      %v789 = vsel %vm786, %v771, %v781
      %v790 = vsel %vm786, %v773, %v783
      %v791 = vsel %vm786, %v775, %v785
      %v792 = vsel %vm786, %v777, %v767
      %v793 = vsel %vm786, %v779, %v769
      %v794 = vsel %vm786, %v781, %v771
      %v795 = vsel %vm786, %v783, %v773
      %v796 = vsel %vm786, %v785, %v775
      %s797 = scalar_lea.vmem %s6, 2
      %v798 = vld [vmem:[%s797] sm:$0x3]
      %v800 = vlaneseq
      %v801 = vshrl.u32 %v800, 7
      %v802 = vsub.s32 0, %v801
      %v803 = vrot.slane %v798, %v802
      %v804 = vlaneseq
      %v805 = vshrl.u32 %v804, 7
      %v806 = vsub.s32 1, %v805
      %v807 = vrot.slane %v798, %v806
      %v810 = vmul.f32 %v792, %v803
      %v811 = vmul.f32 %v787, %v807
      %v812 = vmul.f32 %v793, %v803
      %v813 = vmul.f32 %v788, %v807
      %v814 = vmul.f32 %v794, %v803
      %v815 = vmul.f32 %v789, %v807
      %v816 = vmul.f32 %v795, %v803
      %v817 = vmul.f32 %v790, %v807
      %v818 = vmul.f32 %v796, %v803
      %v819 = vmul.f32 %v791, %v807
      %s820 = scalar_lea.vmem %s4, 32
      %v821 = vld [vmem:[%s820] sm:$0xff]
      %v822 = vld [vmem:[%s820 + $0x8] sm:$0xff]
      %v823 = vld [vmem:[%s820 + $0x10] sm:$0xff]
      %v824 = vld [vmem:[%s820 + $0x18] sm:$0xff]
      %vm825 = vcmask 310272
      %v827 = vsel %vm825, %v821, 0
      %v830 = vsel %vm825, %v822, 0
      %v833 = vsel %vm825, %v823, 0
      %v836 = vsel %vm825, %v824, 0
      %v839 = vsel %vm561, %v818, 0
      %v842 = vsel %vm561, %v819, 0
      %844 = vmatprep.subr.mxu0 0.0
      %845 = vmatpush1.msra.mxu0 0.0
      %846 = vmatprep.subr.mxu0 0.0
      %847 = vmatpush1.msra.mxu0 0.0
      %848 = vmatprep.subr.mxu0 0.0
      %849 = vmatpush1.msra.mxu0 0.0
      %850 = vmatprep.subr.mxu0 0.0
      %851 = vmatpush1.msra.mxu0 0.0
      %852 = vmatprep.subr.mxu0 0.0
      %853 = vmatpush1.msra.mxu0 0.0
      %854 = vmatprep.subr.mxu0 0.0
      %855 = vmatpush1.msra.mxu0 0.0
      %856 = vmatprep.subr.mxu0 0.0
      %857 = vmatpush1.msra.mxu0 0.0
      %858 = vmatprep.subr.mxu0 0.0
      %859 = vmatpush1.msra.mxu0 0.0
      %860 = vmatprep.subr.mxu0 0.0
      %861 = vmatpush1.msra.mxu0 0.0
      %862 = vmatprep.subr.mxu0 0.0
      %863 = vmatpush1.msra.mxu0 0.0
      %864 = vmatprep.subr.mxu0 0.0
      %865 = vmatpush1.msra.mxu0 0.0
      %866 = vmatprep.subr.mxu0 %v842
      %867 = vmatpush1.msra.mxu0 %v839
      %868 = vmatprep.subr.mxu0 %v817
      %869 = vmatpush1.msra.mxu0 %v816
      %870 = vmatprep.subr.mxu0 %v815
      %871 = vmatpush1.msra.mxu0 %v814
      %872 = vmatprep.subr.mxu0 %v813
      %873 = vmatpush1.msra.mxu0 %v812
      %874 = vmatprep.subr.mxu0 %v811
      %875 = vmatpush1.msra.mxu0 %v810
      %876 = vmatprep.subr.mxu0 0.0
      %877 = vmatpush2.msra.mxu0 0.0
      %878 = vmatprep.subr.mxu0 0.0
      %879 = vmatpush2.msra.mxu0 0.0
      %880 = vmatprep.subr.mxu0 0.0
      %881 = vmatpush2.msra.mxu0 0.0
      %882 = vmatprep.subr.mxu0 0.0
      %883 = vmatpush2.msra.mxu0 0.0
      %884 = vmatprep.subr.mxu0 0.0
      %885 = vmatpush2.msra.mxu0 0.0
      %886 = vmatprep.subr.mxu0 0.0
      %887 = vmatpush2.msra.mxu0 0.0
      %888 = vmatprep.subr.mxu0 0.0
      %889 = vmatpush2.msra.mxu0 0.0
      %890 = vmatprep.subr.mxu0 0.0
      %891 = vmatpush2.msra.mxu0 0.0
      %892 = vmatprep.subr.mxu0 0.0
      %893 = vmatpush2.msra.mxu0 0.0
      %894 = vmatprep.subr.mxu0 0.0
      %895 = vmatpush2.msra.mxu0 0.0
      %896 = vmatprep.subr.mxu0 0.0
      %897 = vmatpush2.msra.mxu0 0.0
      %898 = vmatprep.subr.mxu0 0.0
      %899 = vmatpush2.msra.mxu0 0.0
      %900 = vmatprep.subr.mxu0 0.0
      %901 = vmatpush2.msra.mxu0 0.0
      %902 = vmatprep.subr.mxu0 0.0
      %903 = vmatpush2.msra.mxu0 0.0
      %904 = vmatprep.subr.mxu0 0.0
      %905 = vmatpush2.msra.mxu0 0.0
      %906 = vmatprep.subr.mxu0 0.0
      %907 = vmatpush2.msra.mxu0 0.0
      %908 = vmatprep.mubr.f32.mxu0 0.0
      %909 = vmatmul.mubr.f32.gmra.mxu0 %v827
      %v910 = vpop.f32.mrf.mxu0
      %v911 = vadd.f32 0.0, %v910
      %v912 = vpop.f32.mrf.mxu0
      %v913 = vadd.f32 0.0, %v912
      %914 = vmatprep.mubr.f32.mxu0 0.0
      %915 = vmatmul.mubr.f32.gmra.mxu0 %v830
      %v916 = vpop.f32.mrf.mxu0
      %v917 = vadd.f32 0.0, %v916
      %v918 = vpop.f32.mrf.mxu0
      %v919 = vadd.f32 0.0, %v918
      %920 = vmatprep.mubr.f32.mxu0 0.0
      %921 = vmatmul.mubr.f32.gmra.mxu0 %v833
      %v922 = vpop.f32.mrf.mxu0
      %v923 = vadd.f32 0.0, %v922
      %v924 = vpop.f32.mrf.mxu0
      %v925 = vadd.f32 0.0, %v924
      %926 = vmatprep.mubr.f32.mxu0 0.0
      %927 = vmatmul.mubr.f32.gmra.mxu0 %v836
      %v928 = vpop.f32.mrf.mxu0
      %v929 = vadd.f32 0.0, %v928
      %v930 = vpop.f32.mrf.mxu0
      %v931 = vadd.f32 0.0, %v930
      %932 = vdwg.mxu0
      %v934 = vsel %vm825, %v762, 0
      %v937 = vsel %vm825, %v763, 0
      %v940 = vsel %vm825, %v764, 0
      %v943 = vsel %vm825, %v765, 0
      %v946 = vsel %vm561, %v760, 0
      %v949 = vsel %vm561, %v761, 0
      %951 = vmatprep.subr.mxu0 0.0
      %952 = vmatpush1.msra.mxu0 0.0
      %953 = vmatprep.subr.mxu0 0.0
      %954 = vmatpush1.msra.mxu0 0.0
      %955 = vmatprep.subr.mxu0 0.0
      %956 = vmatpush1.msra.mxu0 0.0
      %957 = vmatprep.subr.mxu0 0.0
      %958 = vmatpush1.msra.mxu0 0.0
      %959 = vmatprep.subr.mxu0 0.0
      %960 = vmatpush1.msra.mxu0 0.0
      %961 = vmatprep.subr.mxu0 0.0
      %962 = vmatpush1.msra.mxu0 0.0
      %963 = vmatprep.subr.mxu0 0.0
      %964 = vmatpush1.msra.mxu0 0.0
      %965 = vmatprep.subr.mxu0 0.0
      %966 = vmatpush1.msra.mxu0 0.0
      %967 = vmatprep.subr.mxu0 0.0
      %968 = vmatpush1.msra.mxu0 0.0
      %969 = vmatprep.subr.mxu0 0.0
      %970 = vmatpush1.msra.mxu0 0.0
      %971 = vmatprep.subr.mxu0 0.0
      %972 = vmatpush1.msra.mxu0 0.0
      %973 = vmatprep.subr.mxu0 %v949
      %974 = vmatpush1.msra.mxu0 %v946
      %975 = vmatprep.subr.mxu0 %v759
      %976 = vmatpush1.msra.mxu0 %v758
      %977 = vmatprep.subr.mxu0 %v757
      %978 = vmatpush1.msra.mxu0 %v756
      %979 = vmatprep.subr.mxu0 %v755
      %980 = vmatpush1.msra.mxu0 %v754
      %981 = vmatprep.subr.mxu0 %v753
      %982 = vmatpush1.msra.mxu0 %v752
      %983 = vmatprep.subr.mxu0 0.0
      %984 = vmatpush2.msra.mxu0 0.0
      %985 = vmatprep.subr.mxu0 0.0
      %986 = vmatpush2.msra.mxu0 0.0
      %987 = vmatprep.subr.mxu0 0.0
      %988 = vmatpush2.msra.mxu0 0.0
      %989 = vmatprep.subr.mxu0 0.0
      %990 = vmatpush2.msra.mxu0 0.0
      %991 = vmatprep.subr.mxu0 0.0
      %992 = vmatpush2.msra.mxu0 0.0
      %993 = vmatprep.subr.mxu0 0.0
      %994 = vmatpush2.msra.mxu0 0.0
      %995 = vmatprep.subr.mxu0 0.0
      %996 = vmatpush2.msra.mxu0 0.0
      %997 = vmatprep.subr.mxu0 0.0
      %998 = vmatpush2.msra.mxu0 0.0
      %999 = vmatprep.subr.mxu0 0.0
      %1000 = vmatpush2.msra.mxu0 0.0
      %1001 = vmatprep.subr.mxu0 0.0
      %1002 = vmatpush2.msra.mxu0 0.0
      %1003 = vmatprep.subr.mxu0 0.0
      %1004 = vmatpush2.msra.mxu0 0.0
      %1005 = vmatprep.subr.mxu0 0.0
      %1006 = vmatpush2.msra.mxu0 0.0
      %1007 = vmatprep.subr.mxu0 0.0
      %1008 = vmatpush2.msra.mxu0 0.0
      %1009 = vmatprep.subr.mxu0 0.0
      %1010 = vmatpush2.msra.mxu0 0.0
      %1011 = vmatprep.subr.mxu0 0.0
      %1012 = vmatpush2.msra.mxu0 0.0
      %1013 = vmatprep.subr.mxu0 0.0
      %1014 = vmatpush2.msra.mxu0 0.0
      %1015 = vmatprep.mubr.f32.mxu0 0.0
      %1016 = vmatmul.mubr.f32.gmra.mxu0 %v934
      %v1017 = vpop.f32.mrf.mxu0
      %v1018 = vadd.f32 %v911, %v1017
      %v1019 = vpop.f32.mrf.mxu0
      %v1020 = vadd.f32 %v913, %v1019
      %1021 = vmatprep.mubr.f32.mxu0 0.0
      %1022 = vmatmul.mubr.f32.gmra.mxu0 %v937
      %v1023 = vpop.f32.mrf.mxu0
      %v1024 = vadd.f32 %v917, %v1023
      %v1025 = vpop.f32.mrf.mxu0
      %v1026 = vadd.f32 %v919, %v1025
      %1027 = vmatprep.mubr.f32.mxu0 0.0
      %1028 = vmatmul.mubr.f32.gmra.mxu0 %v940
      %v1029 = vpop.f32.mrf.mxu0
      %v1030 = vadd.f32 %v923, %v1029
      %v1031 = vpop.f32.mrf.mxu0
      %v1032 = vadd.f32 %v925, %v1031
      %1033 = vmatprep.mubr.f32.mxu0 0.0
      %1034 = vmatmul.mubr.f32.gmra.mxu0 %v943
      %v1035 = vpop.f32.mrf.mxu0
      %v1036 = vadd.f32 %v929, %v1035
      %v1037 = vpop.f32.mrf.mxu0
      %v1038 = vadd.f32 %v931, %v1037
      %1039 = vdwg.mxu0
      %1040 = vrot.lane.b32.xlu0 %v697, 15
      %v1041 = vpop.permute.xlu0 %1040
      %1042 = vrot.lane.b32.xlu0 %v699, 15
      %v1043 = vpop.permute.xlu0 %1042
      %1044 = vrot.lane.b32.xlu0 %v701, 15
      %v1045 = vpop.permute.xlu0 %1044
      %1046 = vrot.lane.b32.xlu0 %v703, 15
      %v1047 = vpop.permute.xlu0 %1046
      %1048 = vrot.lane.b32.xlu0 %v705, 15
      %v1049 = vpop.permute.xlu0 %1048
      %1050 = vrot.lane.b32.xlu0 %v698, 15
      %v1051 = vpop.permute.xlu0 %1050
      %1052 = vrot.lane.b32.xlu0 %v700, 15
      %v1053 = vpop.permute.xlu0 %1052
      %1054 = vrot.lane.b32.xlu0 %v702, 15
      %v1055 = vpop.permute.xlu0 %1054
      %1056 = vrot.lane.b32.xlu0 %v704, 15
      %v1057 = vpop.permute.xlu0 %1056
      %1058 = vrot.lane.b32.xlu0 %v706, 15
      %v1059 = vpop.permute.xlu0 %1058
      %vm1060 = vcmp.lt.s32.totalorder %v728, 15
      %v1061 = vsel %vm1060, %v1041, %v1051
      %v1062 = vsel %vm1060, %v1043, %v1053
      %v1063 = vsel %vm1060, %v1045, %v1055
      %v1064 = vsel %vm1060, %v1047, %v1057
      %v1065 = vsel %vm1060, %v1049, %v1059
      %v1066 = vsel %vm1060, %v1051, %v1041
      %v1067 = vsel %vm1060, %v1053, %v1043
      %v1068 = vsel %vm1060, %v1055, %v1045
      %v1069 = vsel %vm1060, %v1057, %v1047
      %v1070 = vsel %vm1060, %v1059, %v1049
      %s1071 = scalar_lea.vmem %s6, 4
      %v1072 = vld [vmem:[%s1071] sm:$0x3]
      %v1074 = vlaneseq
      %v1075 = vshrl.u32 %v1074, 7
      %v1076 = vsub.s32 0, %v1075
      %v1077 = vrot.slane %v1072, %v1076
      %v1078 = vlaneseq
      %v1079 = vshrl.u32 %v1078, 7
      %v1080 = vsub.s32 1, %v1079
      %v1081 = vrot.slane %v1072, %v1080
      %v1084 = vmul.f32 %v1066, %v1077
      %v1085 = vmul.f32 %v1061, %v1081
      %v1086 = vmul.f32 %v1067, %v1077
      %v1087 = vmul.f32 %v1062, %v1081
      %v1088 = vmul.f32 %v1068, %v1077
      %v1089 = vmul.f32 %v1063, %v1081
      %v1090 = vmul.f32 %v1069, %v1077
      %v1091 = vmul.f32 %v1064, %v1081
      %v1092 = vmul.f32 %v1070, %v1077
      %v1093 = vmul.f32 %v1065, %v1081
      %s1094 = scalar_lea.vmem %s4, 64
      %v1095 = vld [vmem:[%s1094] sm:$0xff]
      %v1096 = vld [vmem:[%s1094 + $0x8] sm:$0xff]
      %v1097 = vld [vmem:[%s1094 + $0x10] sm:$0xff]
      %v1098 = vld [vmem:[%s1094 + $0x18] sm:$0xff]
      %v1100 = vsel %vm825, %v1095, 0
      %v1103 = vsel %vm825, %v1096, 0
      %v1106 = vsel %vm825, %v1097, 0
      %v1109 = vsel %vm825, %v1098, 0
      %v1112 = vsel %vm561, %v1092, 0
      %v1115 = vsel %vm561, %v1093, 0
      %1117 = vmatprep.subr.mxu0 0.0
      %1118 = vmatpush1.msra.mxu0 0.0
      %1119 = vmatprep.subr.mxu0 0.0
      %1120 = vmatpush1.msra.mxu0 0.0
      %1121 = vmatprep.subr.mxu0 0.0
      %1122 = vmatpush1.msra.mxu0 0.0
      %1123 = vmatprep.subr.mxu0 0.0
      %1124 = vmatpush1.msra.mxu0 0.0
      %1125 = vmatprep.subr.mxu0 0.0
      %1126 = vmatpush1.msra.mxu0 0.0
      %1127 = vmatprep.subr.mxu0 0.0
      %1128 = vmatpush1.msra.mxu0 0.0
      %1129 = vmatprep.subr.mxu0 0.0
      %1130 = vmatpush1.msra.mxu0 0.0
      %1131 = vmatprep.subr.mxu0 0.0
      %1132 = vmatpush1.msra.mxu0 0.0
      %1133 = vmatprep.subr.mxu0 0.0
      %1134 = vmatpush1.msra.mxu0 0.0
      %1135 = vmatprep.subr.mxu0 0.0
      %1136 = vmatpush1.msra.mxu0 0.0
      %1137 = vmatprep.subr.mxu0 0.0
      %1138 = vmatpush1.msra.mxu0 0.0
      %1139 = vmatprep.subr.mxu0 %v1115
      %1140 = vmatpush1.msra.mxu0 %v1112
      %1141 = vmatprep.subr.mxu0 %v1091
      %1142 = vmatpush1.msra.mxu0 %v1090
      %1143 = vmatprep.subr.mxu0 %v1089
      %1144 = vmatpush1.msra.mxu0 %v1088
      %1145 = vmatprep.subr.mxu0 %v1087
      %1146 = vmatpush1.msra.mxu0 %v1086
      %1147 = vmatprep.subr.mxu0 %v1085
      %1148 = vmatpush1.msra.mxu0 %v1084
      %1149 = vmatprep.subr.mxu0 0.0
      %1150 = vmatpush2.msra.mxu0 0.0
      %1151 = vmatprep.subr.mxu0 0.0
      %1152 = vmatpush2.msra.mxu0 0.0
      %1153 = vmatprep.subr.mxu0 0.0
      %1154 = vmatpush2.msra.mxu0 0.0
      %1155 = vmatprep.subr.mxu0 0.0
      %1156 = vmatpush2.msra.mxu0 0.0
      %1157 = vmatprep.subr.mxu0 0.0
      %1158 = vmatpush2.msra.mxu0 0.0
      %1159 = vmatprep.subr.mxu0 0.0
      %1160 = vmatpush2.msra.mxu0 0.0
      %1161 = vmatprep.subr.mxu0 0.0
      %1162 = vmatpush2.msra.mxu0 0.0
      %1163 = vmatprep.subr.mxu0 0.0
      %1164 = vmatpush2.msra.mxu0 0.0
      %1165 = vmatprep.subr.mxu0 0.0
      %1166 = vmatpush2.msra.mxu0 0.0
      %1167 = vmatprep.subr.mxu0 0.0
      %1168 = vmatpush2.msra.mxu0 0.0
      %1169 = vmatprep.subr.mxu0 0.0
      %1170 = vmatpush2.msra.mxu0 0.0
      %1171 = vmatprep.subr.mxu0 0.0
      %1172 = vmatpush2.msra.mxu0 0.0
      %1173 = vmatprep.subr.mxu0 0.0
      %1174 = vmatpush2.msra.mxu0 0.0
      %1175 = vmatprep.subr.mxu0 0.0
      %1176 = vmatpush2.msra.mxu0 0.0
      %1177 = vmatprep.subr.mxu0 0.0
      %1178 = vmatpush2.msra.mxu0 0.0
      %1179 = vmatprep.subr.mxu0 0.0
      %1180 = vmatpush2.msra.mxu0 0.0
      %1181 = vmatprep.mubr.f32.mxu0 0.0
      %1182 = vmatmul.mubr.f32.gmra.mxu0 %v1100
      %v1183 = vpop.f32.mrf.mxu0
      %v1184 = vadd.f32 0.0, %v1183
      %v1185 = vpop.f32.mrf.mxu0
      %v1186 = vadd.f32 0.0, %v1185
      %1187 = vmatprep.mubr.f32.mxu0 0.0
      %1188 = vmatmul.mubr.f32.gmra.mxu0 %v1103
      %v1189 = vpop.f32.mrf.mxu0
      %v1190 = vadd.f32 0.0, %v1189
      %v1191 = vpop.f32.mrf.mxu0
      %v1192 = vadd.f32 0.0, %v1191
      %1193 = vmatprep.mubr.f32.mxu0 0.0
      %1194 = vmatmul.mubr.f32.gmra.mxu0 %v1106
      %v1195 = vpop.f32.mrf.mxu0
      %v1196 = vadd.f32 0.0, %v1195
      %v1197 = vpop.f32.mrf.mxu0
      %v1198 = vadd.f32 0.0, %v1197
      %1199 = vmatprep.mubr.f32.mxu0 0.0
      %1200 = vmatmul.mubr.f32.gmra.mxu0 %v1109
      %v1201 = vpop.f32.mrf.mxu0
      %v1202 = vadd.f32 0.0, %v1201
      %v1203 = vpop.f32.mrf.mxu0
      %v1204 = vadd.f32 0.0, %v1203
      %1205 = vdwg.mxu0
      %v1206 = vadd.f32 %v1018, %v1184
      %v1207 = vadd.f32 %v1020, %v1186
      %v1208 = vadd.f32 %v1024, %v1190
      %v1209 = vadd.f32 %v1026, %v1192
      %v1210 = vadd.f32 %v1030, %v1196
      %v1211 = vadd.f32 %v1032, %v1198
      %v1212 = vadd.f32 %v1036, %v1202
      %v1213 = vadd.f32 %v1038, %v1204
      %1214 = vrot.lane.b32.xlu0 %v697, 1
      %v1215 = vpop.permute.xlu0 %1214
      %1216 = vrot.lane.b32.xlu0 %v699, 1
      %v1217 = vpop.permute.xlu0 %1216
      %1218 = vrot.lane.b32.xlu0 %v701, 1
      %v1219 = vpop.permute.xlu0 %1218
      %1220 = vrot.lane.b32.xlu0 %v703, 1
      %v1221 = vpop.permute.xlu0 %1220
      %1222 = vrot.lane.b32.xlu0 %v705, 1
      %v1223 = vpop.permute.xlu0 %1222
      %1224 = vrot.lane.b32.xlu0 %v698, 1
      %v1225 = vpop.permute.xlu0 %1224
      %1226 = vrot.lane.b32.xlu0 %v700, 1
      %v1227 = vpop.permute.xlu0 %1226
      %1228 = vrot.lane.b32.xlu0 %v702, 1
      %v1229 = vpop.permute.xlu0 %1228
      %1230 = vrot.lane.b32.xlu0 %v704, 1
      %v1231 = vpop.permute.xlu0 %1230
      %1232 = vrot.lane.b32.xlu0 %v706, 1
      %v1233 = vpop.permute.xlu0 %1232
      %vm1234 = vcmp.lt.s32.totalorder %v728, 1
      %v1235 = vsel %vm1234, %v1215, %v1225
      %v1236 = vsel %vm1234, %v1217, %v1227
      %v1237 = vsel %vm1234, %v1219, %v1229
      %v1238 = vsel %vm1234, %v1221, %v1231
      %v1239 = vsel %vm1234, %v1223, %v1233
      %v1240 = vsel %vm1234, %v1225, %v1215
      %v1241 = vsel %vm1234, %v1227, %v1217
      %v1242 = vsel %vm1234, %v1229, %v1219
      %v1243 = vsel %vm1234, %v1231, %v1221
      %v1244 = vsel %vm1234, %v1233, %v1223
      %s1245 = scalar_lea.vmem %s6, 6
      %v1246 = vld [vmem:[%s1245] sm:$0x3]
      %v1248 = vlaneseq
      %v1249 = vshrl.u32 %v1248, 7
      %v1250 = vsub.s32 0, %v1249
      %v1251 = vrot.slane %v1246, %v1250
      %v1252 = vlaneseq
      %v1253 = vshrl.u32 %v1252, 7
      %v1254 = vsub.s32 1, %v1253
      %v1255 = vrot.slane %v1246, %v1254
      %v1258 = vmul.f32 %v1240, %v1251
      %v1259 = vmul.f32 %v1235, %v1255
      %v1260 = vmul.f32 %v1241, %v1251
      %v1261 = vmul.f32 %v1236, %v1255
      %v1262 = vmul.f32 %v1242, %v1251
      %v1263 = vmul.f32 %v1237, %v1255
      %v1264 = vmul.f32 %v1243, %v1251
      %v1265 = vmul.f32 %v1238, %v1255
      %v1266 = vmul.f32 %v1244, %v1251
      %v1267 = vmul.f32 %v1239, %v1255
      %s1268 = scalar_lea.vmem %s4, 96
      %v1269 = vld [vmem:[%s1268] sm:$0xff]
      %v1270 = vld [vmem:[%s1268 + $0x8] sm:$0xff]
      %v1271 = vld [vmem:[%s1268 + $0x10] sm:$0xff]
      %v1272 = vld [vmem:[%s1268 + $0x18] sm:$0xff]
      %v1274 = vsel %vm825, %v1269, 0
      %v1277 = vsel %vm825, %v1270, 0
      %v1280 = vsel %vm825, %v1271, 0
      %v1283 = vsel %vm825, %v1272, 0
      %v1286 = vsel %vm561, %v1266, 0
      %v1289 = vsel %vm561, %v1267, 0
      %1291 = vmatprep.subr.mxu0 0.0
      %1292 = vmatpush1.msra.mxu0 0.0
      %1293 = vmatprep.subr.mxu0 0.0
      %1294 = vmatpush1.msra.mxu0 0.0
      %1295 = vmatprep.subr.mxu0 0.0
      %1296 = vmatpush1.msra.mxu0 0.0
      %1297 = vmatprep.subr.mxu0 0.0
      %1298 = vmatpush1.msra.mxu0 0.0
      %1299 = vmatprep.subr.mxu0 0.0
      %1300 = vmatpush1.msra.mxu0 0.0
      %1301 = vmatprep.subr.mxu0 0.0
      %1302 = vmatpush1.msra.mxu0 0.0
      %1303 = vmatprep.subr.mxu0 0.0
      %1304 = vmatpush1.msra.mxu0 0.0
      %1305 = vmatprep.subr.mxu0 0.0
      %1306 = vmatpush1.msra.mxu0 0.0
      %1307 = vmatprep.subr.mxu0 0.0
      %1308 = vmatpush1.msra.mxu0 0.0
      %1309 = vmatprep.subr.mxu0 0.0
      %1310 = vmatpush1.msra.mxu0 0.0
      %1311 = vmatprep.subr.mxu0 0.0
      %1312 = vmatpush1.msra.mxu0 0.0
      %1313 = vmatprep.subr.mxu0 %v1289
      %1314 = vmatpush1.msra.mxu0 %v1286
      %1315 = vmatprep.subr.mxu0 %v1265
      %1316 = vmatpush1.msra.mxu0 %v1264
      %1317 = vmatprep.subr.mxu0 %v1263
      %1318 = vmatpush1.msra.mxu0 %v1262
      %1319 = vmatprep.subr.mxu0 %v1261
      %1320 = vmatpush1.msra.mxu0 %v1260
      %1321 = vmatprep.subr.mxu0 %v1259
      %1322 = vmatpush1.msra.mxu0 %v1258
      %1323 = vmatprep.subr.mxu0 0.0
      %1324 = vmatpush2.msra.mxu0 0.0
      %1325 = vmatprep.subr.mxu0 0.0
      %1326 = vmatpush2.msra.mxu0 0.0
      %1327 = vmatprep.subr.mxu0 0.0
      %1328 = vmatpush2.msra.mxu0 0.0
      %1329 = vmatprep.subr.mxu0 0.0
      %1330 = vmatpush2.msra.mxu0 0.0
      %1331 = vmatprep.subr.mxu0 0.0
      %1332 = vmatpush2.msra.mxu0 0.0
      %1333 = vmatprep.subr.mxu0 0.0
      %1334 = vmatpush2.msra.mxu0 0.0
      %1335 = vmatprep.subr.mxu0 0.0
      %1336 = vmatpush2.msra.mxu0 0.0
      %1337 = vmatprep.subr.mxu0 0.0
      %1338 = vmatpush2.msra.mxu0 0.0
      %1339 = vmatprep.subr.mxu0 0.0
      %1340 = vmatpush2.msra.mxu0 0.0
      %1341 = vmatprep.subr.mxu0 0.0
      %1342 = vmatpush2.msra.mxu0 0.0
      %1343 = vmatprep.subr.mxu0 0.0
      %1344 = vmatpush2.msra.mxu0 0.0
      %1345 = vmatprep.subr.mxu0 0.0
      %1346 = vmatpush2.msra.mxu0 0.0
      %1347 = vmatprep.subr.mxu0 0.0
      %1348 = vmatpush2.msra.mxu0 0.0
      %1349 = vmatprep.subr.mxu0 0.0
      %1350 = vmatpush2.msra.mxu0 0.0
      %1351 = vmatprep.subr.mxu0 0.0
      %1352 = vmatpush2.msra.mxu0 0.0
      %1353 = vmatprep.subr.mxu0 0.0
      %1354 = vmatpush2.msra.mxu0 0.0
      %1355 = vmatprep.mubr.f32.mxu0 0.0
      %1356 = vmatmul.mubr.f32.gmra.mxu0 %v1274
      %v1357 = vpop.f32.mrf.mxu0
      %v1358 = vadd.f32 0.0, %v1357
      %v1359 = vpop.f32.mrf.mxu0
      %v1360 = vadd.f32 0.0, %v1359
      %1361 = vmatprep.mubr.f32.mxu0 0.0
      %1362 = vmatmul.mubr.f32.gmra.mxu0 %v1277
      %v1363 = vpop.f32.mrf.mxu0
      %v1364 = vadd.f32 0.0, %v1363
      %v1365 = vpop.f32.mrf.mxu0
      %v1366 = vadd.f32 0.0, %v1365
      %1367 = vmatprep.mubr.f32.mxu0 0.0
      %1368 = vmatmul.mubr.f32.gmra.mxu0 %v1280
      %v1369 = vpop.f32.mrf.mxu0
      %v1370 = vadd.f32 0.0, %v1369
      %v1371 = vpop.f32.mrf.mxu0
      %v1372 = vadd.f32 0.0, %v1371
      %1373 = vmatprep.mubr.f32.mxu0 0.0
      %1374 = vmatmul.mubr.f32.gmra.mxu0 %v1283
      %v1375 = vpop.f32.mrf.mxu0
      %v1376 = vadd.f32 0.0, %v1375
      %v1377 = vpop.f32.mrf.mxu0
      %v1378 = vadd.f32 0.0, %v1377
      %1379 = vdwg.mxu0
      %v1380 = vadd.f32 %v1206, %v1358
      %v1381 = vadd.f32 %v1207, %v1360
      %v1382 = vadd.f32 %v1208, %v1364
      %v1383 = vadd.f32 %v1209, %v1366
      %v1384 = vadd.f32 %v1210, %v1370
      %v1385 = vadd.f32 %v1211, %v1372
      %v1386 = vadd.f32 %v1212, %v1376
      %v1387 = vadd.f32 %v1213, %v1378
      %s1388 = scalar_lea.vmem %s4, 128
      %v1389 = vld [vmem:[%s1388] sm:$0xff]
      %v1390 = vld [vmem:[%s1388 + $0x8] sm:$0xff]
      %v1391 = vld [vmem:[%s1388 + $0x10] sm:$0xff]
      %v1392 = vld [vmem:[%s1388 + $0x18] sm:$0xff]
      %v1394 = vsel %vm825, %v1389, 0
      %v1397 = vsel %vm825, %v1390, 0
      %v1400 = vsel %vm825, %v1391, 0
      %v1403 = vsel %vm825, %v1392, 0
      %v1406 = vsel %vm561, %v705, 0
      %v1409 = vsel %vm561, %v706, 0
      %1411 = vmatprep.subr.mxu0 0.0
      %1412 = vmatpush1.msra.mxu0 0.0
      %1413 = vmatprep.subr.mxu0 0.0
      %1414 = vmatpush1.msra.mxu0 0.0
      %1415 = vmatprep.subr.mxu0 0.0
      %1416 = vmatpush1.msra.mxu0 0.0
      %1417 = vmatprep.subr.mxu0 0.0
      %1418 = vmatpush1.msra.mxu0 0.0
      %1419 = vmatprep.subr.mxu0 0.0
      %1420 = vmatpush1.msra.mxu0 0.0
      %1421 = vmatprep.subr.mxu0 0.0
      %1422 = vmatpush1.msra.mxu0 0.0
      %1423 = vmatprep.subr.mxu0 0.0
      %1424 = vmatpush1.msra.mxu0 0.0
      %1425 = vmatprep.subr.mxu0 0.0
      %1426 = vmatpush1.msra.mxu0 0.0
      %1427 = vmatprep.subr.mxu0 0.0
      %1428 = vmatpush1.msra.mxu0 0.0
      %1429 = vmatprep.subr.mxu0 0.0
      %1430 = vmatpush1.msra.mxu0 0.0
      %1431 = vmatprep.subr.mxu0 0.0
      %1432 = vmatpush1.msra.mxu0 0.0
      %1433 = vmatprep.subr.mxu0 %v1409
      %1434 = vmatpush1.msra.mxu0 %v1406
      %1435 = vmatprep.subr.mxu0 %v704
      %1436 = vmatpush1.msra.mxu0 %v703
      %1437 = vmatprep.subr.mxu0 %v702
      %1438 = vmatpush1.msra.mxu0 %v701
      %1439 = vmatprep.subr.mxu0 %v700
      %1440 = vmatpush1.msra.mxu0 %v699
      %1441 = vmatprep.subr.mxu0 %v698
      %1442 = vmatpush1.msra.mxu0 %v697
      %1443 = vmatprep.subr.mxu0 0.0
      %1444 = vmatpush2.msra.mxu0 0.0
      %1445 = vmatprep.subr.mxu0 0.0
      %1446 = vmatpush2.msra.mxu0 0.0
      %1447 = vmatprep.subr.mxu0 0.0
      %1448 = vmatpush2.msra.mxu0 0.0
      %1449 = vmatprep.subr.mxu0 0.0
      %1450 = vmatpush2.msra.mxu0 0.0
      %1451 = vmatprep.subr.mxu0 0.0
      %1452 = vmatpush2.msra.mxu0 0.0
      %1453 = vmatprep.subr.mxu0 0.0
      %1454 = vmatpush2.msra.mxu0 0.0
      %1455 = vmatprep.subr.mxu0 0.0
      %1456 = vmatpush2.msra.mxu0 0.0
      %1457 = vmatprep.subr.mxu0 0.0
      %1458 = vmatpush2.msra.mxu0 0.0
      %1459 = vmatprep.subr.mxu0 0.0
      %1460 = vmatpush2.msra.mxu0 0.0
      %1461 = vmatprep.subr.mxu0 0.0
      %1462 = vmatpush2.msra.mxu0 0.0
      %1463 = vmatprep.subr.mxu0 0.0
      %1464 = vmatpush2.msra.mxu0 0.0
      %1465 = vmatprep.subr.mxu0 0.0
      %1466 = vmatpush2.msra.mxu0 0.0
      %1467 = vmatprep.subr.mxu0 0.0
      %1468 = vmatpush2.msra.mxu0 0.0
      %1469 = vmatprep.subr.mxu0 0.0
      %1470 = vmatpush2.msra.mxu0 0.0
      %1471 = vmatprep.subr.mxu0 0.0
      %1472 = vmatpush2.msra.mxu0 0.0
      %1473 = vmatprep.subr.mxu0 0.0
      %1474 = vmatpush2.msra.mxu0 0.0
      %1475 = vmatprep.mubr.f32.mxu0 0.0
      %1476 = vmatmul.mubr.f32.gmra.mxu0 %v1394
      %v1477 = vpop.f32.mrf.mxu0
      %v1478 = vadd.f32 0.0, %v1477
      %v1479 = vpop.f32.mrf.mxu0
      %v1480 = vadd.f32 0.0, %v1479
      %1481 = vmatprep.mubr.f32.mxu0 0.0
      %1482 = vmatmul.mubr.f32.gmra.mxu0 %v1397
      %v1483 = vpop.f32.mrf.mxu0
      %v1484 = vadd.f32 0.0, %v1483
      %v1485 = vpop.f32.mrf.mxu0
      %v1486 = vadd.f32 0.0, %v1485
      %1487 = vmatprep.mubr.f32.mxu0 0.0
      %1488 = vmatmul.mubr.f32.gmra.mxu0 %v1400
      %v1489 = vpop.f32.mrf.mxu0
      %v1490 = vadd.f32 0.0, %v1489
      %v1491 = vpop.f32.mrf.mxu0
      %v1492 = vadd.f32 0.0, %v1491
      %1493 = vmatprep.mubr.f32.mxu0 0.0
      %1494 = vmatmul.mubr.f32.gmra.mxu0 %v1403
      %v1495 = vpop.f32.mrf.mxu0
      %v1496 = vadd.f32 0.0, %v1495
      %v1497 = vpop.f32.mrf.mxu0
      %v1498 = vadd.f32 0.0, %v1497
      %1499 = vdwg.mxu0
      %v1500 = vadd.f32 %v1380, %v1478
      %v1501 = vadd.f32 %v1381, %v1480
      %v1502 = vadd.f32 %v1382, %v1484
      %v1503 = vadd.f32 %v1383, %v1486
      %v1504 = vadd.f32 %v1384, %v1490
      %v1505 = vadd.f32 %v1385, %v1492
      %v1506 = vadd.f32 %v1386, %v1496
      %v1507 = vadd.f32 %v1387, %v1498
      %1508 = vrot.lane.b32.xlu0 %v697, 127
      %v1509 = vpop.permute.xlu0 %1508
      %1510 = vrot.lane.b32.xlu0 %v699, 127
      %v1511 = vpop.permute.xlu0 %1510
      %1512 = vrot.lane.b32.xlu0 %v701, 127
      %v1513 = vpop.permute.xlu0 %1512
      %1514 = vrot.lane.b32.xlu0 %v703, 127
      %v1515 = vpop.permute.xlu0 %1514
      %1516 = vrot.lane.b32.xlu0 %v705, 127
      %v1517 = vpop.permute.xlu0 %1516
      %1518 = vrot.lane.b32.xlu0 %v698, 127
      %v1519 = vpop.permute.xlu0 %1518
      %1520 = vrot.lane.b32.xlu0 %v700, 127
      %v1521 = vpop.permute.xlu0 %1520
      %1522 = vrot.lane.b32.xlu0 %v702, 127
      %v1523 = vpop.permute.xlu0 %1522
      %1524 = vrot.lane.b32.xlu0 %v704, 127
      %v1525 = vpop.permute.xlu0 %1524
      %1526 = vrot.lane.b32.xlu0 %v706, 127
      %v1527 = vpop.permute.xlu0 %1526
      %vm1528 = vcmp.lt.s32.totalorder %v728, 127
      %v1529 = vsel %vm1528, %v1509, %v1519
      %v1530 = vsel %vm1528, %v1511, %v1521
      %v1531 = vsel %vm1528, %v1513, %v1523
      %v1532 = vsel %vm1528, %v1515, %v1525
      %v1533 = vsel %vm1528, %v1517, %v1527
      %v1534 = vsel %vm1528, %v1519, %v1509
      %v1535 = vsel %vm1528, %v1521, %v1511
      %v1536 = vsel %vm1528, %v1523, %v1513
      %v1537 = vsel %vm1528, %v1525, %v1515
      %v1538 = vsel %vm1528, %v1527, %v1517
      %s1539 = scalar_lea.vmem %s6, 10
      %v1540 = vld [vmem:[%s1539] sm:$0x3]
      %v1542 = vlaneseq
      %v1543 = vshrl.u32 %v1542, 7
      %v1544 = vsub.s32 0, %v1543
      %v1545 = vrot.slane %v1540, %v1544
      %v1546 = vlaneseq
      %v1547 = vshrl.u32 %v1546, 7
      %v1548 = vsub.s32 1, %v1547
      %v1549 = vrot.slane %v1540, %v1548
      %v1552 = vmul.f32 %v1529, %v1545
      %v1553 = vmul.f32 %v1534, %v1549
      %v1554 = vmul.f32 %v1530, %v1545
      %v1555 = vmul.f32 %v1535, %v1549
      %v1556 = vmul.f32 %v1531, %v1545
      %v1557 = vmul.f32 %v1536, %v1549
      %v1558 = vmul.f32 %v1532, %v1545
      %v1559 = vmul.f32 %v1537, %v1549
      %v1560 = vmul.f32 %v1533, %v1545
      %v1561 = vmul.f32 %v1538, %v1549
      %s1562 = scalar_lea.vmem %s4, 160
      %v1563 = vld [vmem:[%s1562] sm:$0xff]
      %v1564 = vld [vmem:[%s1562 + $0x8] sm:$0xff]
      %v1565 = vld [vmem:[%s1562 + $0x10] sm:$0xff]
      %v1566 = vld [vmem:[%s1562 + $0x18] sm:$0xff]
      %v1568 = vsel %vm825, %v1563, 0
      %v1571 = vsel %vm825, %v1564, 0
      %v1574 = vsel %vm825, %v1565, 0
      %v1577 = vsel %vm825, %v1566, 0
      %v1580 = vsel %vm561, %v1560, 0
      %v1583 = vsel %vm561, %v1561, 0
      %1585 = vmatprep.subr.mxu0 0.0
      %1586 = vmatpush1.msra.mxu0 0.0
      %1587 = vmatprep.subr.mxu0 0.0
      %1588 = vmatpush1.msra.mxu0 0.0
      %1589 = vmatprep.subr.mxu0 0.0
      %1590 = vmatpush1.msra.mxu0 0.0
      %1591 = vmatprep.subr.mxu0 0.0
      %1592 = vmatpush1.msra.mxu0 0.0
      %1593 = vmatprep.subr.mxu0 0.0
      %1594 = vmatpush1.msra.mxu0 0.0
      %1595 = vmatprep.subr.mxu0 0.0
      %1596 = vmatpush1.msra.mxu0 0.0
      %1597 = vmatprep.subr.mxu0 0.0
      %1598 = vmatpush1.msra.mxu0 0.0
      %1599 = vmatprep.subr.mxu0 0.0
      %1600 = vmatpush1.msra.mxu0 0.0
      %1601 = vmatprep.subr.mxu0 0.0
      %1602 = vmatpush1.msra.mxu0 0.0
      %1603 = vmatprep.subr.mxu0 0.0
      %1604 = vmatpush1.msra.mxu0 0.0
      %1605 = vmatprep.subr.mxu0 0.0
      %1606 = vmatpush1.msra.mxu0 0.0
      %1607 = vmatprep.subr.mxu0 %v1583
      %1608 = vmatpush1.msra.mxu0 %v1580
      %1609 = vmatprep.subr.mxu0 %v1559
      %1610 = vmatpush1.msra.mxu0 %v1558
      %1611 = vmatprep.subr.mxu0 %v1557
      %1612 = vmatpush1.msra.mxu0 %v1556
      %1613 = vmatprep.subr.mxu0 %v1555
      %1614 = vmatpush1.msra.mxu0 %v1554
      %1615 = vmatprep.subr.mxu0 %v1553
      %1616 = vmatpush1.msra.mxu0 %v1552
      %1617 = vmatprep.subr.mxu0 0.0
      %1618 = vmatpush2.msra.mxu0 0.0
      %1619 = vmatprep.subr.mxu0 0.0
      %1620 = vmatpush2.msra.mxu0 0.0
      %1621 = vmatprep.subr.mxu0 0.0
      %1622 = vmatpush2.msra.mxu0 0.0
      %1623 = vmatprep.subr.mxu0 0.0
      %1624 = vmatpush2.msra.mxu0 0.0
      %1625 = vmatprep.subr.mxu0 0.0
      %1626 = vmatpush2.msra.mxu0 0.0
      %1627 = vmatprep.subr.mxu0 0.0
      %1628 = vmatpush2.msra.mxu0 0.0
      %1629 = vmatprep.subr.mxu0 0.0
      %1630 = vmatpush2.msra.mxu0 0.0
      %1631 = vmatprep.subr.mxu0 0.0
      %1632 = vmatpush2.msra.mxu0 0.0
      %1633 = vmatprep.subr.mxu0 0.0
      %1634 = vmatpush2.msra.mxu0 0.0
      %1635 = vmatprep.subr.mxu0 0.0
      %1636 = vmatpush2.msra.mxu0 0.0
      %1637 = vmatprep.subr.mxu0 0.0
      %1638 = vmatpush2.msra.mxu0 0.0
      %1639 = vmatprep.subr.mxu0 0.0
      %1640 = vmatpush2.msra.mxu0 0.0
      %1641 = vmatprep.subr.mxu0 0.0
      %1642 = vmatpush2.msra.mxu0 0.0
      %1643 = vmatprep.subr.mxu0 0.0
      %1644 = vmatpush2.msra.mxu0 0.0
      %1645 = vmatprep.subr.mxu0 0.0
      %1646 = vmatpush2.msra.mxu0 0.0
      %1647 = vmatprep.subr.mxu0 0.0
      %1648 = vmatpush2.msra.mxu0 0.0
      %1649 = vmatprep.mubr.f32.mxu0 0.0
      %1650 = vmatmul.mubr.f32.gmra.mxu0 %v1568
      %v1651 = vpop.f32.mrf.mxu0
      %v1652 = vadd.f32 0.0, %v1651
      %v1653 = vpop.f32.mrf.mxu0
      %v1654 = vadd.f32 0.0, %v1653
      %1655 = vmatprep.mubr.f32.mxu0 0.0
      %1656 = vmatmul.mubr.f32.gmra.mxu0 %v1571
      %v1657 = vpop.f32.mrf.mxu0
      %v1658 = vadd.f32 0.0, %v1657
      %v1659 = vpop.f32.mrf.mxu0
      %v1660 = vadd.f32 0.0, %v1659
      %1661 = vmatprep.mubr.f32.mxu0 0.0
      %1662 = vmatmul.mubr.f32.gmra.mxu0 %v1574
      %v1663 = vpop.f32.mrf.mxu0
      %v1664 = vadd.f32 0.0, %v1663
      %v1665 = vpop.f32.mrf.mxu0
      %v1666 = vadd.f32 0.0, %v1665
      %1667 = vmatprep.mubr.f32.mxu0 0.0
      %1668 = vmatmul.mubr.f32.gmra.mxu0 %v1577
      %v1669 = vpop.f32.mrf.mxu0
      %v1670 = vadd.f32 0.0, %v1669
      %v1671 = vpop.f32.mrf.mxu0
      %v1672 = vadd.f32 0.0, %v1671
      %1673 = vdwg.mxu0
      %v1674 = vadd.f32 %v1500, %v1652
      %v1675 = vadd.f32 %v1501, %v1654
      %v1676 = vadd.f32 %v1502, %v1658
      %v1677 = vadd.f32 %v1503, %v1660
      %v1678 = vadd.f32 %v1504, %v1664
      %v1679 = vadd.f32 %v1505, %v1666
      %v1680 = vadd.f32 %v1506, %v1670
      %v1681 = vadd.f32 %v1507, %v1672
      %1682 = vrot.lane.b32.xlu0 %v697, 113
      %v1683 = vpop.permute.xlu0 %1682
      %1684 = vrot.lane.b32.xlu0 %v699, 113
      %v1685 = vpop.permute.xlu0 %1684
      %1686 = vrot.lane.b32.xlu0 %v701, 113
      %v1687 = vpop.permute.xlu0 %1686
      %1688 = vrot.lane.b32.xlu0 %v703, 113
      %v1689 = vpop.permute.xlu0 %1688
      %1690 = vrot.lane.b32.xlu0 %v705, 113
      %v1691 = vpop.permute.xlu0 %1690
      %1692 = vrot.lane.b32.xlu0 %v698, 113
      %v1693 = vpop.permute.xlu0 %1692
      %1694 = vrot.lane.b32.xlu0 %v700, 113
      %v1695 = vpop.permute.xlu0 %1694
      %1696 = vrot.lane.b32.xlu0 %v702, 113
      %v1697 = vpop.permute.xlu0 %1696
      %1698 = vrot.lane.b32.xlu0 %v704, 113
      %v1699 = vpop.permute.xlu0 %1698
      %1700 = vrot.lane.b32.xlu0 %v706, 113
      %v1701 = vpop.permute.xlu0 %1700
      %vm1702 = vcmp.lt.s32.totalorder %v728, 113
      %v1703 = vsel %vm1702, %v1683, %v1693
      %v1704 = vsel %vm1702, %v1685, %v1695
      %v1705 = vsel %vm1702, %v1687, %v1697
      %v1706 = vsel %vm1702, %v1689, %v1699
      %v1707 = vsel %vm1702, %v1691, %v1701
      %v1708 = vsel %vm1702, %v1693, %v1683
      %v1709 = vsel %vm1702, %v1695, %v1685
      %v1710 = vsel %vm1702, %v1697, %v1687
      %v1711 = vsel %vm1702, %v1699, %v1689
      %v1712 = vsel %vm1702, %v1701, %v1691
      %s1713 = scalar_lea.vmem %s6, 12
      %v1714 = vld [vmem:[%s1713] sm:$0x3]
      %v1716 = vlaneseq
      %v1717 = vshrl.u32 %v1716, 7
      %v1718 = vsub.s32 0, %v1717
      %v1719 = vrot.slane %v1714, %v1718
      %v1720 = vlaneseq
      %v1721 = vshrl.u32 %v1720, 7
      %v1722 = vsub.s32 1, %v1721
      %v1723 = vrot.slane %v1714, %v1722
      %v1726 = vmul.f32 %v1703, %v1719
      %v1727 = vmul.f32 %v1708, %v1723
      %v1728 = vmul.f32 %v1704, %v1719
      %v1729 = vmul.f32 %v1709, %v1723
      %v1730 = vmul.f32 %v1705, %v1719
      %v1731 = vmul.f32 %v1710, %v1723
      %v1732 = vmul.f32 %v1706, %v1719
      %v1733 = vmul.f32 %v1711, %v1723
      %v1734 = vmul.f32 %v1707, %v1719
      %v1735 = vmul.f32 %v1712, %v1723
      %s1736 = scalar_lea.vmem %s4, 192
      %v1737 = vld [vmem:[%s1736] sm:$0xff]
      %v1738 = vld [vmem:[%s1736 + $0x8] sm:$0xff]
      %v1739 = vld [vmem:[%s1736 + $0x10] sm:$0xff]
      %v1740 = vld [vmem:[%s1736 + $0x18] sm:$0xff]
      %v1742 = vsel %vm825, %v1737, 0
      %v1745 = vsel %vm825, %v1738, 0
      %v1748 = vsel %vm825, %v1739, 0
      %v1751 = vsel %vm825, %v1740, 0
      %v1754 = vsel %vm561, %v1734, 0
      %v1757 = vsel %vm561, %v1735, 0
      %1759 = vmatprep.subr.mxu0 0.0
      %1760 = vmatpush1.msra.mxu0 0.0
      %1761 = vmatprep.subr.mxu0 0.0
      %1762 = vmatpush1.msra.mxu0 0.0
      %1763 = vmatprep.subr.mxu0 0.0
      %1764 = vmatpush1.msra.mxu0 0.0
      %1765 = vmatprep.subr.mxu0 0.0
      %1766 = vmatpush1.msra.mxu0 0.0
      %1767 = vmatprep.subr.mxu0 0.0
      %1768 = vmatpush1.msra.mxu0 0.0
      %1769 = vmatprep.subr.mxu0 0.0
      %1770 = vmatpush1.msra.mxu0 0.0
      %1771 = vmatprep.subr.mxu0 0.0
      %1772 = vmatpush1.msra.mxu0 0.0
      %1773 = vmatprep.subr.mxu0 0.0
      %1774 = vmatpush1.msra.mxu0 0.0
      %1775 = vmatprep.subr.mxu0 0.0
      %1776 = vmatpush1.msra.mxu0 0.0
      %1777 = vmatprep.subr.mxu0 0.0
      %1778 = vmatpush1.msra.mxu0 0.0
      %1779 = vmatprep.subr.mxu0 0.0
      %1780 = vmatpush1.msra.mxu0 0.0
      %1781 = vmatprep.subr.mxu0 %v1757
      %1782 = vmatpush1.msra.mxu0 %v1754
      %1783 = vmatprep.subr.mxu0 %v1733
      %1784 = vmatpush1.msra.mxu0 %v1732
      %1785 = vmatprep.subr.mxu0 %v1731
      %1786 = vmatpush1.msra.mxu0 %v1730
      %1787 = vmatprep.subr.mxu0 %v1729
      %1788 = vmatpush1.msra.mxu0 %v1728
      %1789 = vmatprep.subr.mxu0 %v1727
      %1790 = vmatpush1.msra.mxu0 %v1726
      %1791 = vmatprep.subr.mxu0 0.0
      %1792 = vmatpush2.msra.mxu0 0.0
      %1793 = vmatprep.subr.mxu0 0.0
      %1794 = vmatpush2.msra.mxu0 0.0
      %1795 = vmatprep.subr.mxu0 0.0
      %1796 = vmatpush2.msra.mxu0 0.0
      %1797 = vmatprep.subr.mxu0 0.0
      %1798 = vmatpush2.msra.mxu0 0.0
      %1799 = vmatprep.subr.mxu0 0.0
      %1800 = vmatpush2.msra.mxu0 0.0
      %1801 = vmatprep.subr.mxu0 0.0
      %1802 = vmatpush2.msra.mxu0 0.0
      %1803 = vmatprep.subr.mxu0 0.0
      %1804 = vmatpush2.msra.mxu0 0.0
      %1805 = vmatprep.subr.mxu0 0.0
      %1806 = vmatpush2.msra.mxu0 0.0
      %1807 = vmatprep.subr.mxu0 0.0
      %1808 = vmatpush2.msra.mxu0 0.0
      %1809 = vmatprep.subr.mxu0 0.0
      %1810 = vmatpush2.msra.mxu0 0.0
      %1811 = vmatprep.subr.mxu0 0.0
      %1812 = vmatpush2.msra.mxu0 0.0
      %1813 = vmatprep.subr.mxu0 0.0
      %1814 = vmatpush2.msra.mxu0 0.0
      %1815 = vmatprep.subr.mxu0 0.0
      %1816 = vmatpush2.msra.mxu0 0.0
      %1817 = vmatprep.subr.mxu0 0.0
      %1818 = vmatpush2.msra.mxu0 0.0
      %1819 = vmatprep.subr.mxu0 0.0
      %1820 = vmatpush2.msra.mxu0 0.0
      %1821 = vmatprep.subr.mxu0 0.0
      %1822 = vmatpush2.msra.mxu0 0.0
      %1823 = vmatprep.mubr.f32.mxu0 0.0
      %1824 = vmatmul.mubr.f32.gmra.mxu0 %v1742
      %v1825 = vpop.f32.mrf.mxu0
      %v1826 = vadd.f32 0.0, %v1825
      %v1827 = vpop.f32.mrf.mxu0
      %v1828 = vadd.f32 0.0, %v1827
      %1829 = vmatprep.mubr.f32.mxu0 0.0
      %1830 = vmatmul.mubr.f32.gmra.mxu0 %v1745
      %v1831 = vpop.f32.mrf.mxu0
      %v1832 = vadd.f32 0.0, %v1831
      %v1833 = vpop.f32.mrf.mxu0
      %v1834 = vadd.f32 0.0, %v1833
      %1835 = vmatprep.mubr.f32.mxu0 0.0
      %1836 = vmatmul.mubr.f32.gmra.mxu0 %v1748
      %v1837 = vpop.f32.mrf.mxu0
      %v1838 = vadd.f32 0.0, %v1837
      %v1839 = vpop.f32.mrf.mxu0
      %v1840 = vadd.f32 0.0, %v1839
      %1841 = vmatprep.mubr.f32.mxu0 0.0
      %1842 = vmatmul.mubr.f32.gmra.mxu0 %v1751
      %v1843 = vpop.f32.mrf.mxu0
      %v1844 = vadd.f32 0.0, %v1843
      %v1845 = vpop.f32.mrf.mxu0
      %v1846 = vadd.f32 0.0, %v1845
      %1847 = vdwg.mxu0
      %v1848 = vadd.f32 %v1674, %v1826
      %v1849 = vadd.f32 %v1675, %v1828
      %v1850 = vadd.f32 %v1676, %v1832
      %v1851 = vadd.f32 %v1677, %v1834
      %v1852 = vadd.f32 %v1678, %v1838
      %v1853 = vadd.f32 %v1679, %v1840
      %v1854 = vadd.f32 %v1680, %v1844
      %v1855 = vadd.f32 %v1681, %v1846
      %1856 = vrot.lane.b32.xlu0 %v697, 112
      %v1857 = vpop.permute.xlu0 %1856
      %1858 = vrot.lane.b32.xlu0 %v699, 112
      %v1859 = vpop.permute.xlu0 %1858
      %1860 = vrot.lane.b32.xlu0 %v701, 112
      %v1861 = vpop.permute.xlu0 %1860
      %1862 = vrot.lane.b32.xlu0 %v703, 112
      %v1863 = vpop.permute.xlu0 %1862
      %1864 = vrot.lane.b32.xlu0 %v705, 112
      %v1865 = vpop.permute.xlu0 %1864
      %1866 = vrot.lane.b32.xlu0 %v698, 112
      %v1867 = vpop.permute.xlu0 %1866
      %1868 = vrot.lane.b32.xlu0 %v700, 112
      %v1869 = vpop.permute.xlu0 %1868
      %1870 = vrot.lane.b32.xlu0 %v702, 112
      %v1871 = vpop.permute.xlu0 %1870
      %1872 = vrot.lane.b32.xlu0 %v704, 112
      %v1873 = vpop.permute.xlu0 %1872
      %1874 = vrot.lane.b32.xlu0 %v706, 112
      %v1875 = vpop.permute.xlu0 %1874
      %vm1876 = vcmp.lt.s32.totalorder %v728, 112
      %v1877 = vsel %vm1876, %v1857, %v1867
      %v1878 = vsel %vm1876, %v1859, %v1869
      %v1879 = vsel %vm1876, %v1861, %v1871
      %v1880 = vsel %vm1876, %v1863, %v1873
      %v1881 = vsel %vm1876, %v1865, %v1875
      %v1882 = vsel %vm1876, %v1867, %v1857
      %v1883 = vsel %vm1876, %v1869, %v1859
      %v1884 = vsel %vm1876, %v1871, %v1861
      %v1885 = vsel %vm1876, %v1873, %v1863
      %v1886 = vsel %vm1876, %v1875, %v1865
      %s1887 = scalar_lea.vmem %s6, 14
      %v1888 = vld [vmem:[%s1887] sm:$0x3]
      %v1890 = vlaneseq
      %v1891 = vshrl.u32 %v1890, 7
      %v1892 = vsub.s32 0, %v1891
      %v1893 = vrot.slane %v1888, %v1892
      %v1894 = vlaneseq
      %v1895 = vshrl.u32 %v1894, 7
      %v1896 = vsub.s32 1, %v1895
      %v1897 = vrot.slane %v1888, %v1896
      %v1900 = vmul.f32 %v1877, %v1893
      %v1901 = vmul.f32 %v1882, %v1897
      %v1902 = vmul.f32 %v1878, %v1893
      %v1903 = vmul.f32 %v1883, %v1897
      %v1904 = vmul.f32 %v1879, %v1893
      %v1905 = vmul.f32 %v1884, %v1897
      %v1906 = vmul.f32 %v1880, %v1893
      %v1907 = vmul.f32 %v1885, %v1897
      %v1908 = vmul.f32 %v1881, %v1893
      %v1909 = vmul.f32 %v1886, %v1897
      %s1910 = scalar_lea.vmem %s4, 224
      %v1911 = vld [vmem:[%s1910] sm:$0xff]
      %v1912 = vld [vmem:[%s1910 + $0x8] sm:$0xff]
      %v1913 = vld [vmem:[%s1910 + $0x10] sm:$0xff]
      %v1914 = vld [vmem:[%s1910 + $0x18] sm:$0xff]
      %v1916 = vsel %vm825, %v1911, 0
      %v1919 = vsel %vm825, %v1912, 0
      %v1922 = vsel %vm825, %v1913, 0
      %v1925 = vsel %vm825, %v1914, 0
      %v1928 = vsel %vm561, %v1908, 0
      %v1931 = vsel %vm561, %v1909, 0
      %1933 = vmatprep.subr.mxu0 0.0
      %1934 = vmatpush1.msra.mxu0 0.0
      %1935 = vmatprep.subr.mxu0 0.0
      %1936 = vmatpush1.msra.mxu0 0.0
      %1937 = vmatprep.subr.mxu0 0.0
      %1938 = vmatpush1.msra.mxu0 0.0
      %1939 = vmatprep.subr.mxu0 0.0
      %1940 = vmatpush1.msra.mxu0 0.0
      %1941 = vmatprep.subr.mxu0 0.0
      %1942 = vmatpush1.msra.mxu0 0.0
      %1943 = vmatprep.subr.mxu0 0.0
      %1944 = vmatpush1.msra.mxu0 0.0
      %1945 = vmatprep.subr.mxu0 0.0
      %1946 = vmatpush1.msra.mxu0 0.0
      %1947 = vmatprep.subr.mxu0 0.0
      %1948 = vmatpush1.msra.mxu0 0.0
      %1949 = vmatprep.subr.mxu0 0.0
      %1950 = vmatpush1.msra.mxu0 0.0
      %1951 = vmatprep.subr.mxu0 0.0
      %1952 = vmatpush1.msra.mxu0 0.0
      %1953 = vmatprep.subr.mxu0 0.0
      %1954 = vmatpush1.msra.mxu0 0.0
      %1955 = vmatprep.subr.mxu0 %v1931
      %1956 = vmatpush1.msra.mxu0 %v1928
      %1957 = vmatprep.subr.mxu0 %v1907
      %1958 = vmatpush1.msra.mxu0 %v1906
      %1959 = vmatprep.subr.mxu0 %v1905
      %1960 = vmatpush1.msra.mxu0 %v1904
      %1961 = vmatprep.subr.mxu0 %v1903
      %1962 = vmatpush1.msra.mxu0 %v1902
      %1963 = vmatprep.subr.mxu0 %v1901
      %1964 = vmatpush1.msra.mxu0 %v1900
      %1965 = vmatprep.subr.mxu0 0.0
      %1966 = vmatpush2.msra.mxu0 0.0
      %1967 = vmatprep.subr.mxu0 0.0
      %1968 = vmatpush2.msra.mxu0 0.0
      %1969 = vmatprep.subr.mxu0 0.0
      %1970 = vmatpush2.msra.mxu0 0.0
      %1971 = vmatprep.subr.mxu0 0.0
      %1972 = vmatpush2.msra.mxu0 0.0
      %1973 = vmatprep.subr.mxu0 0.0
      %1974 = vmatpush2.msra.mxu0 0.0
      %1975 = vmatprep.subr.mxu0 0.0
      %1976 = vmatpush2.msra.mxu0 0.0
      %1977 = vmatprep.subr.mxu0 0.0
      %1978 = vmatpush2.msra.mxu0 0.0
      %1979 = vmatprep.subr.mxu0 0.0
      %1980 = vmatpush2.msra.mxu0 0.0
      %1981 = vmatprep.subr.mxu0 0.0
      %1982 = vmatpush2.msra.mxu0 0.0
      %1983 = vmatprep.subr.mxu0 0.0
      %1984 = vmatpush2.msra.mxu0 0.0
      %1985 = vmatprep.subr.mxu0 0.0
      %1986 = vmatpush2.msra.mxu0 0.0
      %1987 = vmatprep.subr.mxu0 0.0
      %1988 = vmatpush2.msra.mxu0 0.0
      %1989 = vmatprep.subr.mxu0 0.0
      %1990 = vmatpush2.msra.mxu0 0.0
      %1991 = vmatprep.subr.mxu0 0.0
      %1992 = vmatpush2.msra.mxu0 0.0
      %1993 = vmatprep.subr.mxu0 0.0
      %1994 = vmatpush2.msra.mxu0 0.0
      %1995 = vmatprep.subr.mxu0 0.0
      %1996 = vmatpush2.msra.mxu0 0.0
      %1997 = vmatprep.mubr.f32.mxu0 0.0
      %1998 = vmatmul.mubr.f32.gmra.mxu0 %v1916
      %v1999 = vpop.f32.mrf.mxu0
      %v2000 = vadd.f32 0.0, %v1999
      %v2001 = vpop.f32.mrf.mxu0
      %v2002 = vadd.f32 0.0, %v2001
      %2003 = vmatprep.mubr.f32.mxu0 0.0
      %2004 = vmatmul.mubr.f32.gmra.mxu0 %v1919
      %v2005 = vpop.f32.mrf.mxu0
      %v2006 = vadd.f32 0.0, %v2005
      %v2007 = vpop.f32.mrf.mxu0
      %v2008 = vadd.f32 0.0, %v2007
      %2009 = vmatprep.mubr.f32.mxu0 0.0
      %2010 = vmatmul.mubr.f32.gmra.mxu0 %v1922
      %v2011 = vpop.f32.mrf.mxu0
      %v2012 = vadd.f32 0.0, %v2011
      %v2013 = vpop.f32.mrf.mxu0
      %v2014 = vadd.f32 0.0, %v2013
      %2015 = vmatprep.mubr.f32.mxu0 0.0
      %2016 = vmatmul.mubr.f32.gmra.mxu0 %v1925
      %v2017 = vpop.f32.mrf.mxu0
      %v2018 = vadd.f32 0.0, %v2017
      %v2019 = vpop.f32.mrf.mxu0
      %v2020 = vadd.f32 0.0, %v2019
      %2021 = vdwg.mxu0
      %v2022 = vadd.f32 %v1848, %v2000
      %v2023 = vadd.f32 %v1849, %v2002
      %v2024 = vadd.f32 %v1850, %v2006
      %v2025 = vadd.f32 %v1851, %v2008
      %v2026 = vadd.f32 %v1852, %v2012
      %v2027 = vadd.f32 %v1853, %v2014
      %v2028 = vadd.f32 %v1854, %v2018
      %v2029 = vadd.f32 %v1855, %v2020
      %2030 = vrot.lane.b32.xlu0 %v697, 111
      %v2031 = vpop.permute.xlu0 %2030
      %2032 = vrot.lane.b32.xlu0 %v699, 111
      %v2033 = vpop.permute.xlu0 %2032
      %2034 = vrot.lane.b32.xlu0 %v701, 111
      %v2035 = vpop.permute.xlu0 %2034
      %2036 = vrot.lane.b32.xlu0 %v703, 111
      %v2037 = vpop.permute.xlu0 %2036
      %2038 = vrot.lane.b32.xlu0 %v705, 111
      %v2039 = vpop.permute.xlu0 %2038
      %2040 = vrot.lane.b32.xlu0 %v698, 111
      %v2041 = vpop.permute.xlu0 %2040
      %2042 = vrot.lane.b32.xlu0 %v700, 111
      %v2043 = vpop.permute.xlu0 %2042
      %2044 = vrot.lane.b32.xlu0 %v702, 111
      %v2045 = vpop.permute.xlu0 %2044
      %2046 = vrot.lane.b32.xlu0 %v704, 111
      %v2047 = vpop.permute.xlu0 %2046
      %2048 = vrot.lane.b32.xlu0 %v706, 111
      %v2049 = vpop.permute.xlu0 %2048
      %vm2050 = vcmp.lt.s32.totalorder %v728, 111
      %v2051 = vsel %vm2050, %v2031, %v2041
      %v2052 = vsel %vm2050, %v2033, %v2043
      %v2053 = vsel %vm2050, %v2035, %v2045
      %v2054 = vsel %vm2050, %v2037, %v2047
      %v2055 = vsel %vm2050, %v2039, %v2049
      %v2056 = vsel %vm2050, %v2041, %v2031
      %v2057 = vsel %vm2050, %v2043, %v2033
      %v2058 = vsel %vm2050, %v2045, %v2035
      %v2059 = vsel %vm2050, %v2047, %v2037
      %v2060 = vsel %vm2050, %v2049, %v2039
      %s2061 = scalar_lea.vmem %s6, 16
      %v2062 = vld [vmem:[%s2061] sm:$0x3]
      %v2064 = vlaneseq
      %v2065 = vshrl.u32 %v2064, 7
      %v2066 = vsub.s32 0, %v2065
      %v2067 = vrot.slane %v2062, %v2066
      %v2068 = vlaneseq
      %v2069 = vshrl.u32 %v2068, 7
      %v2070 = vsub.s32 1, %v2069
      %v2071 = vrot.slane %v2062, %v2070
      %v2074 = vmul.f32 %v2051, %v2067
      %v2075 = vmul.f32 %v2056, %v2071
      %v2076 = vmul.f32 %v2052, %v2067
      %v2077 = vmul.f32 %v2057, %v2071
      %v2078 = vmul.f32 %v2053, %v2067
      %v2079 = vmul.f32 %v2058, %v2071
      %v2080 = vmul.f32 %v2054, %v2067
      %v2081 = vmul.f32 %v2059, %v2071
      %v2082 = vmul.f32 %v2055, %v2067
      %v2083 = vmul.f32 %v2060, %v2071
      %s2084 = scalar_lea.vmem %s4, 256
      %v2085 = vld [vmem:[%s2084] sm:$0xff]
      %v2086 = vld [vmem:[%s2084 + $0x8] sm:$0xff]
      %v2087 = vld [vmem:[%s2084 + $0x10] sm:$0xff]
      %v2088 = vld [vmem:[%s2084 + $0x18] sm:$0xff]
      %v2090 = vsel %vm825, %v2085, 0
      %v2093 = vsel %vm825, %v2086, 0
      %v2096 = vsel %vm825, %v2087, 0
      %v2099 = vsel %vm825, %v2088, 0
      %v2102 = vsel %vm561, %v2082, 0
      %v2105 = vsel %vm561, %v2083, 0
      %2107 = vmatprep.subr.mxu0 0.0
      %2108 = vmatpush1.msra.mxu0 0.0
      %2109 = vmatprep.subr.mxu0 0.0
      %2110 = vmatpush1.msra.mxu0 0.0
      %2111 = vmatprep.subr.mxu0 0.0
      %2112 = vmatpush1.msra.mxu0 0.0
      %2113 = vmatprep.subr.mxu0 0.0
      %2114 = vmatpush1.msra.mxu0 0.0
      %2115 = vmatprep.subr.mxu0 0.0
      %2116 = vmatpush1.msra.mxu0 0.0
      %2117 = vmatprep.subr.mxu0 0.0
      %2118 = vmatpush1.msra.mxu0 0.0
      %2119 = vmatprep.subr.mxu0 0.0
      %2120 = vmatpush1.msra.mxu0 0.0
      %2121 = vmatprep.subr.mxu0 0.0
      %2122 = vmatpush1.msra.mxu0 0.0
      %2123 = vmatprep.subr.mxu0 0.0
      %2124 = vmatpush1.msra.mxu0 0.0
      %2125 = vmatprep.subr.mxu0 0.0
      %2126 = vmatpush1.msra.mxu0 0.0
      %2127 = vmatprep.subr.mxu0 0.0
      %2128 = vmatpush1.msra.mxu0 0.0
      %2129 = vmatprep.subr.mxu0 %v2105
      %2130 = vmatpush1.msra.mxu0 %v2102
      %2131 = vmatprep.subr.mxu0 %v2081
      %2132 = vmatpush1.msra.mxu0 %v2080
      %2133 = vmatprep.subr.mxu0 %v2079
      %2134 = vmatpush1.msra.mxu0 %v2078
      %2135 = vmatprep.subr.mxu0 %v2077
      %2136 = vmatpush1.msra.mxu0 %v2076
      %2137 = vmatprep.subr.mxu0 %v2075
      %2138 = vmatpush1.msra.mxu0 %v2074
      %2139 = vmatprep.subr.mxu0 0.0
      %2140 = vmatpush2.msra.mxu0 0.0
      %2141 = vmatprep.subr.mxu0 0.0
      %2142 = vmatpush2.msra.mxu0 0.0
      %2143 = vmatprep.subr.mxu0 0.0
      %2144 = vmatpush2.msra.mxu0 0.0
      %2145 = vmatprep.subr.mxu0 0.0
      %2146 = vmatpush2.msra.mxu0 0.0
      %2147 = vmatprep.subr.mxu0 0.0
      %2148 = vmatpush2.msra.mxu0 0.0
      %2149 = vmatprep.subr.mxu0 0.0
      %2150 = vmatpush2.msra.mxu0 0.0
      %2151 = vmatprep.subr.mxu0 0.0
      %2152 = vmatpush2.msra.mxu0 0.0
      %2153 = vmatprep.subr.mxu0 0.0
      %2154 = vmatpush2.msra.mxu0 0.0
      %2155 = vmatprep.subr.mxu0 0.0
      %2156 = vmatpush2.msra.mxu0 0.0
      %2157 = vmatprep.subr.mxu0 0.0
      %2158 = vmatpush2.msra.mxu0 0.0
      %2159 = vmatprep.subr.mxu0 0.0
      %2160 = vmatpush2.msra.mxu0 0.0
      %2161 = vmatprep.subr.mxu0 0.0
      %2162 = vmatpush2.msra.mxu0 0.0
      %2163 = vmatprep.subr.mxu0 0.0
      %2164 = vmatpush2.msra.mxu0 0.0
      %2165 = vmatprep.subr.mxu0 0.0
      %2166 = vmatpush2.msra.mxu0 0.0
      %2167 = vmatprep.subr.mxu0 0.0
      %2168 = vmatpush2.msra.mxu0 0.0
      %2169 = vmatprep.subr.mxu0 0.0
      %2170 = vmatpush2.msra.mxu0 0.0
      %2171 = vmatprep.mubr.f32.mxu0 0.0
      %2172 = vmatmul.mubr.f32.gmra.mxu0 %v2090
      %v2173 = vpop.f32.mrf.mxu0
      %v2174 = vadd.f32 0.0, %v2173
      %v2175 = vpop.f32.mrf.mxu0
      %v2176 = vadd.f32 0.0, %v2175
      %2177 = vmatprep.mubr.f32.mxu0 0.0
      %2178 = vmatmul.mubr.f32.gmra.mxu0 %v2093
      %v2179 = vpop.f32.mrf.mxu0
      %v2180 = vadd.f32 0.0, %v2179
      %v2181 = vpop.f32.mrf.mxu0
      %v2182 = vadd.f32 0.0, %v2181
      %2183 = vmatprep.mubr.f32.mxu0 0.0
      %2184 = vmatmul.mubr.f32.gmra.mxu0 %v2096
      %v2185 = vpop.f32.mrf.mxu0
      %v2186 = vadd.f32 0.0, %v2185
      %v2187 = vpop.f32.mrf.mxu0
      %v2188 = vadd.f32 0.0, %v2187
      %2189 = vmatprep.mubr.f32.mxu0 0.0
      %2190 = vmatmul.mubr.f32.gmra.mxu0 %v2099
      %v2191 = vpop.f32.mrf.mxu0
      %v2192 = vadd.f32 0.0, %v2191
      %v2193 = vpop.f32.mrf.mxu0
      %v2194 = vadd.f32 0.0, %v2193
      %2195 = vdwg.mxu0
      %v2196 = vadd.f32 %v2022, %v2174
      %v2197 = vadd.f32 %v2023, %v2176
      %v2198 = vadd.f32 %v2024, %v2180
      %v2199 = vadd.f32 %v2025, %v2182
      %v2200 = vadd.f32 %v2026, %v2186
      %v2201 = vadd.f32 %v2027, %v2188
      %v2202 = vadd.f32 %v2028, %v2192
      %v2203 = vadd.f32 %v2029, %v2194
      %v2204 = vld [vmem:[%s5] sm:$0xff]
      %v2205 = vld [vmem:[%s5 + $0x8] sm:$0xff]
      %v2206 = vld [vmem:[%s5 + $0x10] sm:$0xff]
      %v2207 = vld [vmem:[%s5 + $0x18] sm:$0xff]
      %2209 = vset.pattern.permute.xlu0 0
      %2210 = vperm.xlu0 %2209, %v2204
      %v2211 = vpop.permute.xlu0 %2210
      %2214 = vset.pattern.permute.xlu0 0
      %2215 = vperm.xlu0 %2214, %v2205
      %v2216 = vpop.permute.xlu0 %2215
      %2219 = vset.pattern.permute.xlu0 0
      %2220 = vperm.xlu0 %2219, %v2206
      %v2221 = vpop.permute.xlu0 %2220
      %2224 = vset.pattern.permute.xlu0 0
      %2225 = vperm.xlu0 %2224, %v2207
      %v2226 = vpop.permute.xlu0 %2225
      %v2228 = vadd.f32 %v2196, %v2211
      %v2229 = vadd.f32 %v2197, %v2211
      %v2230 = vadd.f32 %v2198, %v2216
      %v2231 = vadd.f32 %v2199, %v2216
      %v2232 = vadd.f32 %v2200, %v2221
      %v2233 = vadd.f32 %v2201, %v2221
      %v2234 = vadd.f32 %v2202, %v2226
      %v2235 = vadd.f32 %v2203, %v2226
      %v2236 = vmax.f32 %v2228, 0.0
      %v2237 = vmax.f32 %v2229, 0.0
      %v2238 = vmax.f32 %v2230, 0.0
      %v2239 = vmax.f32 %v2231, 0.0
      %v2240 = vmax.f32 %v2232, 0.0
      %v2241 = vmax.f32 %v2233, 0.0
      %v2242 = vmax.f32 %v2234, 0.0
      %v2243 = vmax.f32 %v2235, 0.0
      %2244 = vst [vmem:[%s363] sm:$0xff] %v2236
      %2245 = vst [vmem:[%s363 + $0x8] sm:$0xff] %v2237
      %2246 = vst [vmem:[%s363 + $0x10] sm:$0xff] %v2238
      %2247 = vst [vmem:[%s363 + $0x18] sm:$0xff] %v2239
      %2248 = vst [vmem:[%s363 + $0x20] sm:$0xff] %v2240
      %2249 = vst [vmem:[%s363 + $0x28] sm:$0xff] %v2241
      %2250 = vst [vmem:[%s363 + $0x30] sm:$0xff] %v2242
      %2251 = vst [vmem:[%s363 + $0x38] sm:$0xff] %v2243
      %p2252 = scmp.lt.s32.totalorder %s21, 1
      %s2253 = scalar_select %p2252, %s21, 1
      %s2254 = smul.addr %s2253, 8
      %s2255 = smul.addr %s2254, 8
      %s2256 = scalar_lea.vmem %s7, %s2255
      %p2257 = scmp.lt.s32.totalorder %s21, 1
      %s2258 = scalar_select %p2257, %s21, 1
      %s2259 = smul.addr %s2258, 2
      %s2260 = scalar_lea.vmem %s8, %s2259
      %p2261 = scmp.lt.s32.totalorder %s21, 1
      %s2262 = scalar_select %p2261, %s21, 1
      %s2263 = smul.addr %s2262, 2
      %s2264 = smul.addr %s2263, 8
      %s2265 = scalar_lea.vmem %s9, %s2264
      // Predicated region
      $region49: #{unsupervised_semantic_discovery.1} parent=47 // pred_check
        %p2266 = pneg %p196
      $region50: #{unsupervised_semantic_discovery.1} parent=47 // pred_check_branch
        %2268 = sbr.rel (%p2266) target = $region52
      $region51: #{unsupervised_semantic_discovery.1} parent=47 // pred_region
        _
      $region52: #{unsupervised_semantic_discovery.1} parent=47 // pred_fallthru
        _
      // Predicated region
      $region53: #{unsupervised_semantic_discovery.1} parent=47 // pred_check
        %p2269 = pneg %p222
      $region54: #{unsupervised_semantic_discovery.1} parent=47 // pred_check_branch
        %2271 = sbr.rel (%p2269) target = $region56
      $region55: #{unsupervised_semantic_discovery.1} parent=47 // pred_region
        _
      $region56: #{unsupervised_semantic_discovery.1} parent=47 // pred_fallthru
        _
      // Predicated region
      $region57: #{unsupervised_semantic_discovery.1} parent=47 // pred_check
        %p2272 = pneg %p248
      $region58: #{unsupervised_semantic_discovery.1} parent=47 // pred_check_branch
        %2274 = sbr.rel (%p2272) target = $region60
      $region59: #{unsupervised_semantic_discovery.1} parent=47 // pred_region
        _
      $region60: #{unsupervised_semantic_discovery.1} parent=47 // pred_fallthru
        _
    $region48: #{unsupervised_semantic_discovery.1} parent=5 // pred_fallthru
      _
    %p2275 = scmp.le.s32.totalorder 2, %s16
    // Predicated region
    $region61: #{unsupervised_semantic_discovery.1} parent=5 // pred_check
      %p2276 = pneg %p2275
    $region62: #{unsupervised_semantic_discovery.1} parent=5 // pred_check_branch
      %2278 = sbr.rel (%p2276) target = $region64
    $region63: #{unsupervised_semantic_discovery.1} parent=5 // pred_region
      %s2279 = ssub.s32 %s16, 2
      // Predicated region
      $region65: #{unsupervised_semantic_discovery.1} parent=63 // pred_check
        %p2280 = pneg %p202
      $region66: #{unsupervised_semantic_discovery.1} parent=63 // pred_check_branch
        %2282 = sbr.rel (%p2280) target = $region68
      $region67: #{unsupervised_semantic_discovery.1} parent=63 // pred_region
        %p2283 = scmp.lt.s32.totalorder %s22, 1
        %s2284 = scalar_select %p2283, %s22, 1
        %s2285 = smul.addr %s2284, 8
        %s2286 = smul.addr %s2285, 8
        %s2287 = scalar_lea.vmem %s7, %s2286
      $region68: #{unsupervised_semantic_discovery.1} parent=63 // pred_fallthru
        _
      // Predicated region
      $region69: #{unsupervised_semantic_discovery.1} parent=63 // pred_check
        %p2288 = pneg %p228
      $region70: #{unsupervised_semantic_discovery.1} parent=63 // pred_check_branch
        %2290 = sbr.rel (%p2288) target = $region72
      $region71: #{unsupervised_semantic_discovery.1} parent=63 // pred_region
        %p2291 = scmp.lt.s32.totalorder %s22, 1
        %s2292 = scalar_select %p2291, %s22, 1
        %s2293 = smul.addr %s2292, 2
        %s2294 = scalar_lea.vmem %s8, %s2293
      $region72: #{unsupervised_semantic_discovery.1} parent=63 // pred_fallthru
        _
      // Predicated region
      $region73: #{unsupervised_semantic_discovery.1} parent=63 // pred_check
        %p2295 = pneg %p254
      $region74: #{unsupervised_semantic_discovery.1} parent=63 // pred_check_branch
        %2297 = sbr.rel (%p2295) target = $region76
      $region75: #{unsupervised_semantic_discovery.1} parent=63 // pred_region
        %p2298 = scmp.lt.s32.totalorder %s22, 1
        %s2299 = scalar_select %p2298, %s22, 1
        %s2300 = smul.addr %s2299, 2
        %s2301 = smul.addr %s2300, 8
        %s2302 = scalar_lea.vmem %s9, %s2301
      $region76: #{unsupervised_semantic_discovery.1} parent=63 // pred_fallthru
        _
    $region64: #{unsupervised_semantic_discovery.1} parent=5 // pred_fallthru
      _
  $region6: #{unsupervised_semantic_discovery.1} parent=0 // loop_footer
    %s20 = sadd.s32 1, %s16
  $region7: #{unsupervised_semantic_discovery.1} parent=0 // loop_footer_branch
    %15 = sbr.rel target = $region3
  $region8: #{unsupervised_semantic_discovery.1} parent=0 // loop_exit
    _

</llo_original>
